<compile_context>
chip_gen: v7x
topology: tpu7x:2x2x1
jax: 0.10.0
libtpu: 0.0.40
codegen_flags: <defaults>
</compile_context>

<pallas_src>
import functools

import jax
import jax.numpy as jnp
from jax.experimental import pallas as pl
from jax.experimental.pallas import tpu as pltpu

_LANE = 128
_MiB = 1024 * 1024


# --------------------------------------------------------------------------- #
# Kernel
# --------------------------------------------------------------------------- #
def _residual_block_kernel(x_ref, w1_ref, b1_ref, w2_ref, b2_ref, o_ref, *,
                           L, K, pad, mxu_dtype, fuse_taps):
    """One block of TB batch samples per grid step.

    x_ref : (TB, L + 4*pad, Cp)  channel-padded NLC input; the wrapper baked a
                                 2*pad zero halo onto each end of the L axis.
    w1_ref: (K*Cp, Cp)           tap-fused conv1 weights, row = t*Cp + ci, col = co
    b1_ref: (1, Cp)
    w2_ref: (K*Cp, Cp)           tap-fused conv2 weights
    b2_ref: (1, Cp)
    o_ref : (TB, L, Cp)
    """
    TB = x_ref.shape[0]
    Cp = x_ref.shape[2]
    Lh = L + 2 * pad                       # extended conv1 output length
    x_h = x_ref[...]                       # (TB, L + 4*pad, Cp) f32

    def conv(a3, length, w_ref):
        """'Same'-style conv over `length` rows. `a3` already carries a pad-row
        halo on each side (a3 has length + 2*pad rows). Returns f32
        (TB*length, Cp) pre-bias accumulator."""
        a_m = a3.astype(mxu_dtype)
        if fuse_taps:
            # All K taps fused into one MXU contraction (fills the K-dim on
            # v6e/v7x 256-wide MXUs).
            slabs = [a_m[:, t:t + length, :] for t in range(K)]
            lhs = jnp.concatenate(slabs, axis=-1).reshape(TB * length, K * Cp)
            return jnp.dot(lhs, w_ref[...], preferred_element_type=jnp.float32)
        # Per-tap accumulation: same MXU flops, ~K× less vector-store traffic
        # (no replicated activation slab) — preferred on v5e.
        acc = None
        for t in range(K):
            lhs_t = a_m[:, t:t + length, :].reshape(TB * length, Cp)
            d = jnp.dot(lhs_t, w_ref[t * Cp:(t + 1) * Cp, :],
                        preferred_element_type=jnp.float32)
            acc = d if acc is None else acc + d
        return acc

    # ---- conv1 + bias + ReLU, evaluated on the extended range [-pad, L+pad) ----
    acc1 = conv(x_h, Lh, w1_ref)                                # (TB*Lh, Cp)
    h = jnp.maximum(acc1 + b1_ref[...], 0.0).reshape(TB, Lh, Cp)
    if pad > 0:
        # conv2's "same" padding must see zeros, not conv1 evaluated out of range.
        j = jax.lax.broadcasted_iota(jnp.int32, (TB, Lh, Cp), 1)
        h = jnp.where((j >= pad) & (j < pad + L), h, 0.0)
    # dropout(p=0.2): identity in eval mode

    # ---- conv2 + bias: halo comes straight from the masked extended h ----------
    acc2 = conv(h, L, w2_ref)                                   # (TB*L, Cp)

    # ---- residual add (exact f32 input) + ReLU ---------------------------------
    x_res = x_h[:, 2 * pad:2 * pad + L, :].reshape(TB * L, Cp)
    out = jnp.maximum(acc2 + b2_ref[...] + x_res, 0.0)
    # dropout(p=0.2): identity in eval mode
    o_ref[...] = out.reshape(TB, L, Cp).astype(o_ref.dtype)


# --------------------------------------------------------------------------- #
# Generation / VMEM-aware sizing helpers
# --------------------------------------------------------------------------- #
def _tpu_generation():
    """Best-effort TPU generation (5, 6, 7, ...) from device_kind; None if unknown."""
    try:
        kind = jax.devices()[0].device_kind.lower()
    except Exception:
        return None
    digits = ""
    for ch in kind:
        if ch.isdigit():
            digits += ch
        elif digits:
            break
    return int(digits) if digits else None


def _vmem_capacity_bytes(gen):
    try:
        cap = int(pltpu.get_tpu_info().vmem_capacity_bytes)
        if cap > 0:
            return cap
    except Exception:
        pass
    # Conservative fallbacks: v7x (and unknown) 64 MiB, v5e/v6e 128 MiB.
    if gen is None or gen >= 7:
        return 64 * _MiB
    return 128 * _MiB


def _pick_block_batch(N, L, Cp, K, pad, x_bytes, w_bytes, usable_vmem,
                      max_rows=4096):
    """Largest divisor TB of N whose per-step footprint fits the VMEM budget,
    keeping >= 2 grid steps (megacore + pipeline overlap) and <= max_rows rows."""
    Lh = L + 2 * pad
    Lin = L + 4 * pad
    w_const = 2 * (K * Cp * Cp * w_bytes + Cp * 4)      # single-buffered w + b

    def footprint(tb):
        xblk = tb * Lin * Cp * x_bytes                  # input block
        oblk = tb * L * Cp * x_bytes                    # output block
        tmp = (tb * Lh * K * Cp * w_bytes               # conv1 lhs (fused worst case)
               + tb * L * K * Cp * w_bytes              # conv2 lhs
               + tb * Lh * Cp * 4                       # h_ext (f32)
               + 3 * tb * Lh * Cp * 4)                  # accs / relayout temporaries
        return 2 * (xblk + oblk) + w_const + tmp        # in/out double-buffered

    best = 1
    for d in range(1, N + 1):
        if N % d:
            continue
        if N >= 2 and N // d < 2:
            continue
        if d * L > max_rows:
            continue
        if footprint(d) > usable_vmem:
            continue
        best = d
    return best, footprint(best)


# --------------------------------------------------------------------------- #
# Wrapper
# --------------------------------------------------------------------------- #
def residual_block(x_ncl, w1, b1, w2, b2, *, use_bf16_mxu=None, fuse_taps=None):
    """x_ncl: (N, C, L) float32 (PyTorch Conv1d layout).
    w1, w2: (C_out, C_in, K) PyTorch layout; b1, b2: (C_out,)."""
    N, C, L = x_ncl.shape
    C_out, C_in, K = w1.shape
    assert C_in == C and C_out == C, "residual add requires in_channels == out_channels"
    assert K % 2 == 1, "same-length output requires odd kernel_size"
    pad = (K - 1) // 2

    Cp = ((C + _LANE - 1) // _LANE) * _LANE            # lane-dense channel count

    gen = _tpu_generation()
    if use_bf16_mxu is None:
        use_bf16_mxu = gen is not None and gen >= 6    # bf16-native MXUs on v6e/v7x
    if fuse_taps is None:
        fuse_taps = gen is None or gen >= 6            # v5e: per-tap accumulation

    mxu_dtype = jnp.bfloat16 if use_bf16_mxu else jnp.float32
    x_bytes = jnp.dtype(x_ncl.dtype).itemsize
    w_bytes = jnp.dtype(mxu_dtype).itemsize

    cap = _vmem_capacity_bytes(gen)
    usable = min(int(cap * 3 // 4), 100 * _MiB)        # headroom; >=~48 MiB on v7x
    TB, fp = _pick_block_batch(N, L, Cp, K, pad, x_bytes, w_bytes, usable)
    vmem_limit = int(min(usable, max(2 * fp, 16 * _MiB)))

    # Layout prep: NCL -> NLC; one fused pad op adds the 2*pad zero halo along L
    # and the lane-dense channel pad.
    x_nlc = jnp.transpose(x_ncl, (0, 2, 1))                           # (N, L, C)
    x_blk = jnp.pad(x_nlc, ((0, 0), (2 * pad, 2 * pad), (0, Cp - C)))  # (N, L+4p, Cp)

    # PyTorch (Cout, Cin, K) -> tap-fused (K*Cp, Cp): row = t*Cp + ci, col = co.
    def fuse_w(w):
        w_t = jnp.transpose(w, (2, 1, 0))                              # (K, Cin, Cout)
        w_p = jnp.pad(w_t, ((0, 0), (0, Cp - C), (0, Cp - C)))         # (K, Cp, Cp)
        return w_p.reshape(K * Cp, Cp).astype(mxu_dtype)

    w1_f = fuse_w(w1)
    w2_f = fuse_w(w2)
    b1_p = jnp.pad(b1, (0, Cp - C)).reshape(1, Cp).astype(jnp.float32)
    b2_p = jnp.pad(b2, (0, Cp - C)).reshape(1, Cp).astype(jnp.float32)

    Lh = L + 2 * pad
    flops = 2 * (N * Lh + N * L) * (K * Cp) * Cp       # two convs, MAC = 2 flops
    bytes_accessed = ((N * (L + 4 * pad) + N * L) * Cp * x_bytes
                      + 2 * K * Cp * Cp * w_bytes + 2 * Cp * 4)

    kernel = functools.partial(_residual_block_kernel, L=L, K=K, pad=pad,
                               mxu_dtype=mxu_dtype, fuse_taps=fuse_taps)

    def build_and_call(single_buffer_consts):
        # Weights/biases use the same block every grid step; single-buffering
        # them halves their VMEM footprint (most valuable on v7x's 64 MiB).
        const_kw = {"pipeline_mode": pl.Buffered(1)} if single_buffer_consts else {}
        grid_spec = pltpu.PrefetchScalarGridSpec(
            num_scalar_prefetch=0,
            grid=(N // TB,),
            in_specs=[
                pl.BlockSpec((TB, L + 4 * pad, Cp), lambda n: (n, 0, 0)),
                pl.BlockSpec((K * Cp, Cp), lambda n: (0, 0), **const_kw),
                pl.BlockSpec((1, Cp), lambda n: (0, 0), **const_kw),
                pl.BlockSpec((K * Cp, Cp), lambda n: (0, 0), **const_kw),
                pl.BlockSpec((1, Cp), lambda n: (0, 0), **const_kw),
            ],
            out_specs=pl.BlockSpec((TB, L, Cp), lambda n: (n, 0, 0)),
        )
        return pl.pallas_call(
            kernel,
            out_shape=jax.ShapeDtypeStruct((N, L, Cp), x_ncl.dtype),
            grid_spec=grid_spec,
            compiler_params=pltpu.CompilerParams(
                dimension_semantics=("parallel",),
                vmem_limit_bytes=vmem_limit),
            cost_estimate=pl.CostEstimate(flops=int(flops), transcendentals=0,
                                          bytes_accessed=int(bytes_accessed)),
        )(x_blk, w1_f, b1_p, w2_f, b2_p)

    try:
        out_nlc = build_and_call(True)
    except Exception:
        # Fallback if this build rejects pipeline_mode=pl.Buffered(1); default
        # double-buffered constant specs are functionally identical.
        out_nlc = build_and_call(False)

    # drop channel padding (before the transpose), NLC -> NCL for PyTorch layout.
    return jnp.transpose(out_nlc[:, :, :C], (0, 2, 1))


# --------------------------------------------------------------------------- #
# Pure-JAX reference (PyTorch cross-correlation semantics)
# --------------------------------------------------------------------------- #
def _reference(x_ncl, w1, b1, w2, b2):
    K = w1.shape[-1]
    pad = (K - 1) // 2
    dn = jax.lax.conv_dimension_numbers(x_ncl.shape, w1.shape, ('NCH', 'OIH', 'NCH'))
    h = jax.lax.conv_general_dilated(x_ncl, w1, (1,), [(pad, pad)],
                                     dimension_numbers=dn) + b1[None, :, None]
    h = jnp.maximum(h, 0.0)
    o = jax.lax.conv_general_dilated(h, w2, (1,), [(pad, pad)],
                                     dimension_numbers=dn) + b2[None, :, None]
    return jnp.maximum(o + x_ncl, 0.0)


if __name__ == "__main__":
    N, C, L, K = 2, 4, 16, 3  # batch, channels (= in = out), length, kernel_size

    key = jax.random.PRNGKey(0)
    k_x, k_w1, k_b1, k_w2, k_b2 = jax.random.split(key, 5)
    x = jax.random.normal(k_x, (N, C, L), dtype=jnp.float32)
    # deterministic synthetic Conv1d parameters (PyTorch shapes)
    w1 = 0.1 * jax.random.normal(k_w1, (C, C, K), dtype=jnp.float32)
    b1 = 0.1 * jax.random.normal(k_b1, (C,), dtype=jnp.float32)
    w2 = 0.1 * jax.random.normal(k_w2, (C, C, K), dtype=jnp.float32)
    b2 = 0.1 * jax.random.normal(k_b2, (C,), dtype=jnp.float32)

    ref = _reference(x, w1, b1, w2, b2)

    # Exercise both tap schedules with exact f32 MXU operands (bit-tight check).
    for fuse in (True, False):
        out = residual_block(x, w1, b1, w2, b2, use_bf16_mxu=False, fuse_taps=fuse)
        out = jax.block_until_ready(out)
        assert out.shape == (N, C, L)
        assert jnp.allclose(out, ref, atol=1e-5, rtol=1e-5), \
            f"mismatch vs JAX reference (fuse_taps={fuse})"

    # Auto (generation-default) path: bf16 MXU operands on v6e/v7x -> loose tolerance.
    out_auto = jax.block_until_ready(residual_block(x, w1, b1, w2, b2))
    assert out_auto.shape == (N, C, L)
    assert jnp.allclose(out_auto, ref, atol=3e-2, rtol=3e-2), "mismatch (auto path)"

    print("KERNEL_OK")
</pallas_src>

<mosaic_0001>
module attributes {stable_mosaic.version = 11 : i64} {
  func.func @_residual_block_kernel(%arg0: i32, %arg1: memref<1x20x128xf32, #tpu.memory_space<vmem>>, %arg2: memref<384x128xf32, #tpu.memory_space<vmem>>, %arg3: memref<1x128xf32, #tpu.memory_space<vmem>>, %arg4: memref<384x128xf32, #tpu.memory_space<vmem>>, %arg5: memref<1x128xf32, #tpu.memory_space<vmem>>, %arg6: memref<1x16x128xf32, #tpu.memory_space<vmem>>) attributes {dimension_semantics = [#tpu.dimension_semantics<parallel>], iteration_bounds = array<i64: 2>, scalar_prefetch = 0 : i64, scratch_operands = 0 : i64, tpu.core_type = #tpu.core_type<tc>, window_params = [{transform_indices = @transform_0, window_bounds = array<i64: 1, 20, 128>}, {pipeline_mode = #tpu.pipeline_mode<synchronous>, transform_indices = @transform_1, window_bounds = array<i64: 384, 128>}, {pipeline_mode = #tpu.pipeline_mode<synchronous>, transform_indices = @transform_2, window_bounds = array<i64: 1, 128>}, {pipeline_mode = #tpu.pipeline_mode<synchronous>, transform_indices = @transform_3, window_bounds = array<i64: 384, 128>}, {pipeline_mode = #tpu.pipeline_mode<synchronous>, transform_indices = @transform_4, window_bounds = array<i64: 1, 128>}, {transform_indices = @transform_5, window_bounds = array<i64: 1, 16, 128>}]} {
    %c0 = arith.constant 0 : index
    %c0_0 = arith.constant 0 : index
    %c0_1 = arith.constant 0 : index
    %0 = vector.load %arg1[%c0, %c0_0, %c0_1] : memref<1x20x128xf32, #tpu.memory_space<vmem>>, vector<1x20x128xf32>
    %1 = vector.extract_strided_slice %0 {offsets = [0, 0, 0], sizes = [1, 18, 128], strides = [1, 1, 1]} : vector<1x20x128xf32> to vector<1x18x128xf32>
    %2 = vector.extract_strided_slice %0 {offsets = [0, 1, 0], sizes = [1, 18, 128], strides = [1, 1, 1]} : vector<1x20x128xf32> to vector<1x18x128xf32>
    %3 = vector.extract_strided_slice %0 {offsets = [0, 2, 0], sizes = [1, 18, 128], strides = [1, 1, 1]} : vector<1x20x128xf32> to vector<1x18x128xf32>
    %4 = tpu.concatenate %1, %2, %3 in 2 : vector<1x18x128xf32>, vector<1x18x128xf32>, vector<1x18x128xf32> -> vector<1x18x384xf32>
    %5 = vector.shape_cast %4 : vector<1x18x384xf32> to vector<18x384xf32>
    %c0_2 = arith.constant 0 : index
    %c0_3 = arith.constant 0 : index
    %6 = vector.load %arg2[%c0_2, %c0_3] : memref<384x128xf32, #tpu.memory_space<vmem>>, vector<384x128xf32>
    %cst = arith.constant dense<0.000000e+00> : vector<18x128xf32>
    %7 = tpu.matmul %5, %6, %cst {dimension_numbers = #tpu.dot_dimension_numbers<[1], [0], [0], [1], [0, 0, 1, 1], [], []>} : vector<18x384xf32>, vector<384x128xf32>, vector<18x128xf32> -> vector<18x128xf32>
    %c0_4 = arith.constant 0 : index
    %c0_5 = arith.constant 0 : index
    %8 = vector.load %arg3[%c0_4, %c0_5] : memref<1x128xf32, #tpu.memory_space<vmem>>, vector<1x128xf32>
    %9 = vector.broadcast %8 : vector<1x128xf32> to vector<18x128xf32>
    %10 = arith.addf %7, %9 : vector<18x128xf32>
    %cst_6 = arith.constant 0.000000e+00 : f32
    %11 = vector.broadcast %cst_6 : f32 to vector<18x128xf32>
    %12 = arith.maximumf %10, %11 : vector<18x128xf32>
    %13 = vector.shape_cast %12 : vector<18x128xf32> to vector<1x18x128xf32>
    %14 = tpu.iota {dimensions = array<i32: 1>} : vector<1x18x128xi32>
    %c1_i32 = arith.constant 1 : i32
    %15 = vector.broadcast %c1_i32 : i32 to vector<1x18x128xi32>
    %16 = arith.cmpi sge, %14, %15 : vector<1x18x128xi32>
    %c17_i32 = arith.constant 17 : i32
    %17 = vector.broadcast %c17_i32 : i32 to vector<1x18x128xi32>
    %18 = arith.cmpi slt, %14, %17 : vector<1x18x128xi32>
    %19 = arith.andi %16, %18 : vector<1x18x128xi1>
    %cst_7 = arith.constant 0.000000e+00 : f32
    %20 = vector.broadcast %cst_7 : f32 to vector<1x18x128xf32>
    %21 = arith.select %19, %13, %20 : vector<1x18x128xi1>, vector<1x18x128xf32>
    %22 = vector.extract_strided_slice %21 {offsets = [0, 0, 0], sizes = [1, 16, 128], strides = [1, 1, 1]} : vector<1x18x128xf32> to vector<1x16x128xf32>
    %23 = vector.extract_strided_slice %21 {offsets = [0, 1, 0], sizes = [1, 16, 128], strides = [1, 1, 1]} : vector<1x18x128xf32> to vector<1x16x128xf32>
    %24 = vector.extract_strided_slice %21 {offsets = [0, 2, 0], sizes = [1, 16, 128], strides = [1, 1, 1]} : vector<1x18x128xf32> to vector<1x16x128xf32>
    %25 = tpu.concatenate %22, %23, %24 in 2 : vector<1x16x128xf32>, vector<1x16x128xf32>, vector<1x16x128xf32> -> vector<1x16x384xf32>
    %26 = vector.shape_cast %25 : vector<1x16x384xf32> to vector<16x384xf32>
    %c0_8 = arith.constant 0 : index
    %c0_9 = arith.constant 0 : index
    %27 = vector.load %arg4[%c0_8, %c0_9] : memref<384x128xf32, #tpu.memory_space<vmem>>, vector<384x128xf32>
    %cst_10 = arith.constant dense<0.000000e+00> : vector<16x128xf32>
    %28 = tpu.matmul %26, %27, %cst_10 {dimension_numbers = #tpu.dot_dimension_numbers<[1], [0], [0], [1], [0, 0, 1, 1], [], []>} : vector<16x384xf32>, vector<384x128xf32>, vector<16x128xf32> -> vector<16x128xf32>
    %29 = vector.extract_strided_slice %0 {offsets = [0, 2, 0], sizes = [1, 16, 128], strides = [1, 1, 1]} : vector<1x20x128xf32> to vector<1x16x128xf32>
    %30 = vector.shape_cast %29 : vector<1x16x128xf32> to vector<16x128xf32>
    %c0_11 = arith.constant 0 : index
    %c0_12 = arith.constant 0 : index
    %31 = vector.load %arg5[%c0_11, %c0_12] : memref<1x128xf32, #tpu.memory_space<vmem>>, vector<1x128xf32>
    %32 = vector.broadcast %31 : vector<1x128xf32> to vector<16x128xf32>
    %33 = arith.addf %28, %32 : vector<16x128xf32>
    %34 = arith.addf %33, %30 : vector<16x128xf32>
    %cst_13 = arith.constant 0.000000e+00 : f32
    %35 = vector.broadcast %cst_13 : f32 to vector<16x128xf32>
    %36 = arith.maximumf %34, %35 : vector<16x128xf32>
    %37 = vector.shape_cast %36 : vector<16x128xf32> to vector<1x16x128xf32>
    %c0_14 = arith.constant 0 : index
    %c0_15 = arith.constant 0 : index
    %c0_16 = arith.constant 0 : index
    %38 = vector.load %arg6[%c0_14, %c0_15, %c0_16] : memref<1x16x128xf32, #tpu.memory_space<vmem>>, vector<1x16x128xf32>
    tpu.vector_store %arg6[%c0_14, %c0_15, %c0_16], %37 {strides = array<i32>} : memref<1x16x128xf32, #tpu.memory_space<vmem>>, vector<1x16x128xf32>,
    return
  }
  func.func @transform_0(%arg0: i32) -> (i32, i32, i32) {
    %c0_i32 = arith.constant 0 : i32
    %c0_i32_0 = arith.constant 0 : i32
    %c0_i32_1 = arith.constant 0 : i32
    return %arg0, %c0_i32, %c0_i32_0 : i32, i32, i32
  }
  func.func @transform_1(%arg0: i32) -> (i32, i32) {
    %c0_i32 = arith.constant 0 : i32
    %c0_i32_0 = arith.constant 0 : i32
    %c0_i32_1 = arith.constant 0 : i32
    return %c0_i32, %c0_i32_0 : i32, i32
  }
  func.func @transform_2(%arg0: i32) -> (i32, i32) {
    %c0_i32 = arith.constant 0 : i32
    %c0_i32_0 = arith.constant 0 : i32
    %c0_i32_1 = arith.constant 0 : i32
    return %c0_i32, %c0_i32_0 : i32, i32
  }
  func.func @transform_3(%arg0: i32) -> (i32, i32) {
    %c0_i32 = arith.constant 0 : i32
    %c0_i32_0 = arith.constant 0 : i32
    %c0_i32_1 = arith.constant 0 : i32
    return %c0_i32, %c0_i32_0 : i32, i32
  }
  func.func @transform_4(%arg0: i32) -> (i32, i32) {
    %c0_i32 = arith.constant 0 : i32
    %c0_i32_0 = arith.constant 0 : i32
    %c0_i32_1 = arith.constant 0 : i32
    return %c0_i32, %c0_i32_0 : i32, i32
  }
  func.func @transform_5(%arg0: i32) -> (i32, i32, i32) {
    %c0_i32 = arith.constant 0 : i32
    %c0_i32_0 = arith.constant 0 : i32
    %c0_i32_1 = arith.constant 0 : i32
    return %arg0, %c0_i32, %c0_i32_0 : i32, i32, i32
  }
}

module attributes {stable_mosaic.version = 11 : i64} {
  func.func @_residual_block_kernel(%arg0: i32, %arg1: memref<1x20x128xf32, #tpu.memory_space<vmem>>, %arg2: memref<384x128xf32, #tpu.memory_space<vmem>>, %arg3: memref<1x128xf32, #tpu.memory_space<vmem>>, %arg4: memref<384x128xf32, #tpu.memory_space<vmem>>, %arg5: memref<1x128xf32, #tpu.memory_space<vmem>>, %arg6: memref<1x16x128xf32, #tpu.memory_space<vmem>>) attributes {dimension_semantics = [#tpu.dimension_semantics<parallel>], iteration_bounds = array<i64: 2>, scalar_prefetch = 0 : i64, scratch_operands = 0 : i64, tpu.core_type = #tpu.core_type<tc>, window_params = [{transform_indices = @transform_0, window_bounds = array<i64: 1, 20, 128>}, {pipeline_mode = #tpu.pipeline_mode<synchronous>, transform_indices = @transform_1, window_bounds = array<i64: 384, 128>}, {pipeline_mode = #tpu.pipeline_mode<synchronous>, transform_indices = @transform_2, window_bounds = array<i64: 1, 128>}, {pipeline_mode = #tpu.pipeline_mode<synchronous>, transform_indices = @transform_3, window_bounds = array<i64: 384, 128>}, {pipeline_mode = #tpu.pipeline_mode<synchronous>, transform_indices = @transform_4, window_bounds = array<i64: 1, 128>}, {transform_indices = @transform_5, window_bounds = array<i64: 1, 16, 128>}]} {
    %c0 = arith.constant 0 : index
    %c0_0 = arith.constant 0 : index
    %c0_1 = arith.constant 0 : index
    %0 = vector.load %arg1[%c0, %c0_0, %c0_1] : memref<1x20x128xf32, #tpu.memory_space<vmem>>, vector<1x20x128xf32>
    %1 = vector.extract_strided_slice %0 {offsets = [0, 0, 0], sizes = [1, 18, 128], strides = [1, 1, 1]} : vector<1x20x128xf32> to vector<1x18x128xf32>
    %2 = vector.extract_strided_slice %0 {offsets = [0, 1, 0], sizes = [1, 18, 128], strides = [1, 1, 1]} : vector<1x20x128xf32> to vector<1x18x128xf32>
    %3 = vector.extract_strided_slice %0 {offsets = [0, 2, 0], sizes = [1, 18, 128], strides = [1, 1, 1]} : vector<1x20x128xf32> to vector<1x18x128xf32>
    %4 = tpu.concatenate %1, %2, %3 in 2 : vector<1x18x128xf32>, vector<1x18x128xf32>, vector<1x18x128xf32> -> vector<1x18x384xf32>
    %5 = vector.shape_cast %4 : vector<1x18x384xf32> to vector<18x384xf32>
    %c0_2 = arith.constant 0 : index
    %c0_3 = arith.constant 0 : index
    %6 = vector.load %arg2[%c0_2, %c0_3] : memref<384x128xf32, #tpu.memory_space<vmem>>, vector<384x128xf32>
    %cst = arith.constant dense<0.000000e+00> : vector<18x128xf32>
    %7 = tpu.matmul %5, %6, %cst {dimension_numbers = #tpu.dot_dimension_numbers<[1], [0], [0], [1], [0, 0, 1, 1], [], []>} : vector<18x384xf32>, vector<384x128xf32>, vector<18x128xf32> -> vector<18x128xf32>
    %c0_4 = arith.constant 0 : index
    %c0_5 = arith.constant 0 : index
    %8 = vector.load %arg3[%c0_4, %c0_5] : memref<1x128xf32, #tpu.memory_space<vmem>>, vector<1x128xf32>
    %9 = vector.broadcast %8 : vector<1x128xf32> to vector<18x128xf32>
    %10 = arith.addf %7, %9 : vector<18x128xf32>
    %cst_6 = arith.constant 0.000000e+00 : f32
    %11 = vector.broadcast %cst_6 : f32 to vector<18x128xf32>
    %12 = arith.maximumf %10, %11 : vector<18x128xf32>
    %13 = vector.shape_cast %12 : vector<18x128xf32> to vector<1x18x128xf32>
    %14 = tpu.iota {dimensions = array<i32: 1>} : vector<1x18x128xi32>
    %c1_i32 = arith.constant 1 : i32
    %15 = vector.broadcast %c1_i32 : i32 to vector<1x18x128xi32>
    %16 = arith.cmpi sge, %14, %15 : vector<1x18x128xi32>
    %c17_i32 = arith.constant 17 : i32
    %17 = vector.broadcast %c17_i32 : i32 to vector<1x18x128xi32>
    %18 = arith.cmpi slt, %14, %17 : vector<1x18x128xi32>
    %19 = arith.andi %16, %18 : vector<1x18x128xi1>
    %cst_7 = arith.constant 0.000000e+00 : f32
    %20 = vector.broadcast %cst_7 : f32 to vector<1x18x128xf32>
    %21 = arith.select %19, %13, %20 : vector<1x18x128xi1>, vector<1x18x128xf32>
    %22 = vector.extract_strided_slice %21 {offsets = [0, 0, 0], sizes = [1, 16, 128], strides = [1, 1, 1]} : vector<1x18x128xf32> to vector<1x16x128xf32>
    %23 = vector.extract_strided_slice %21 {offsets = [0, 1, 0], sizes = [1, 16, 128], strides = [1, 1, 1]} : vector<1x18x128xf32> to vector<1x16x128xf32>
    %24 = vector.extract_strided_slice %21 {offsets = [0, 2, 0], sizes = [1, 16, 128], strides = [1, 1, 1]} : vector<1x18x128xf32> to vector<1x16x128xf32>
    %25 = tpu.concatenate %22, %23, %24 in 2 : vector<1x16x128xf32>, vector<1x16x128xf32>, vector<1x16x128xf32> -> vector<1x16x384xf32>
    %26 = vector.shape_cast %25 : vector<1x16x384xf32> to vector<16x384xf32>
    %c0_8 = arith.constant 0 : index
    %c0_9 = arith.constant 0 : index
    %27 = vector.load %arg4[%c0_8, %c0_9] : memref<384x128xf32, #tpu.memory_space<vmem>>, vector<384x128xf32>
    %cst_10 = arith.constant dense<0.000000e+00> : vector<16x128xf32>
    %28 = tpu.matmul %26, %27, %cst_10 {dimension_numbers = #tpu.dot_dimension_numbers<[1], [0], [0], [1], [0, 0, 1, 1], [], []>} : vector<16x384xf32>, vector<384x128xf32>, vector<16x128xf32> -> vector<16x128xf32>
    %29 = vector.extract_strided_slice %0 {offsets = [0, 2, 0], sizes = [1, 16, 128], strides = [1, 1, 1]} : vector<1x20x128xf32> to vector<1x16x128xf32>
    %30 = vector.shape_cast %29 : vector<1x16x128xf32> to vector<16x128xf32>
    %c0_11 = arith.constant 0 : index
    %c0_12 = arith.constant 0 : index
    %31 = vector.load %arg5[%c0_11, %c0_12] : memref<1x128xf32, #tpu.memory_space<vmem>>, vector<1x128xf32>
    %32 = vector.broadcast %31 : vector<1x128xf32> to vector<16x128xf32>
    %33 = arith.addf %28, %32 : vector<16x128xf32>
    %34 = arith.addf %33, %30 : vector<16x128xf32>
    %cst_13 = arith.constant 0.000000e+00 : f32
    %35 = vector.broadcast %cst_13 : f32 to vector<16x128xf32>
    %36 = arith.maximumf %34, %35 : vector<16x128xf32>
    %37 = vector.shape_cast %36 : vector<16x128xf32> to vector<1x16x128xf32>
    %c0_14 = arith.constant 0 : index
    %c0_15 = arith.constant 0 : index
    %c0_16 = arith.constant 0 : index
    %38 = vector.load %arg6[%c0_14, %c0_15, %c0_16] : memref<1x16x128xf32, #tpu.memory_space<vmem>>, vector<1x16x128xf32>
    tpu.vector_store %arg6[%c0_14, %c0_15, %c0_16], %37 {strides = array<i32>} : memref<1x16x128xf32, #tpu.memory_space<vmem>>, vector<1x16x128xf32>,
    return
  }
  func.func @transform_0(%arg0: i32) -> (i32, i32, i32) {
    %c0_i32 = arith.constant 0 : i32
    %c0_i32_0 = arith.constant 0 : i32
    %c0_i32_1 = arith.constant 0 : i32
    return %arg0, %c0_i32, %c0_i32_0 : i32, i32, i32
  }
  func.func @transform_1(%arg0: i32) -> (i32, i32) {
    %c0_i32 = arith.constant 0 : i32
    %c0_i32_0 = arith.constant 0 : i32
    %c0_i32_1 = arith.constant 0 : i32
    return %c0_i32, %c0_i32_0 : i32, i32
  }
  func.func @transform_2(%arg0: i32) -> (i32, i32) {
    %c0_i32 = arith.constant 0 : i32
    %c0_i32_0 = arith.constant 0 : i32
    %c0_i32_1 = arith.constant 0 : i32
    return %c0_i32, %c0_i32_0 : i32, i32
  }
  func.func @transform_3(%arg0: i32) -> (i32, i32) {
    %c0_i32 = arith.constant 0 : i32
    %c0_i32_0 = arith.constant 0 : i32
    %c0_i32_1 = arith.constant 0 : i32
    return %c0_i32, %c0_i32_0 : i32, i32
  }
  func.func @transform_4(%arg0: i32) -> (i32, i32) {
    %c0_i32 = arith.constant 0 : i32
    %c0_i32_0 = arith.constant 0 : i32
    %c0_i32_1 = arith.constant 0 : i32
    return %c0_i32, %c0_i32_0 : i32, i32
  }
  func.func @transform_5(%arg0: i32) -> (i32, i32, i32) {
    %c0_i32 = arith.constant 0 : i32
    %c0_i32_0 = arith.constant 0 : i32
    %c0_i32_1 = arith.constant 0 : i32
    return %arg0, %c0_i32, %c0_i32_0 : i32, i32, i32
  }
}

</mosaic_0001>

<llo_original>
// kernel: tpu_custom_call.1
$region0: #{tpu_custom_call.1}
  #allocation0 [shape = 'u32[]', space=smem, size = 0x4, offset = 0x4, fixed_abs, tag = 'smem constant byte address 0x4 - core index']
  #allocation1 [shape = 'u32[144,128]{1,0:T(1,128)}', space=vmem, size = 0x12000, scoped, tag = 'internal scratch']
  %s0 = inlined_call_operand.vmem [shape: f32[2,20,128], index: 0, kind: input, shape index: {}]
  %s1 = inlined_call_operand.hbm [shape: f32[384,128], index: 1, kind: input, shape index: {}]
  %s2 = inlined_call_operand.vmem [shape: f32[1,128], index: 2, kind: input, shape index: {}]
  %s3 = inlined_call_operand.hbm [shape: f32[384,128], index: 3, kind: input, shape index: {}]
  %s4 = inlined_call_operand.vmem [shape: f32[1,128], index: 4, kind: input, shape index: {}]
  %s5 = inlined_call_operand.hbm [shape: f32[2,16,128], index: 5, kind: output, shape index: {}]
  %s6 = sld [smem:[#allocation0]]
  $region61: #{tpu_custom_call.1} parent=0
    _
  %s8 = ssub.s32 1, %s6
  %s9 = scalar_select 0, %s8, %s6
  $region1: #{tpu_custom_call.1} parent=0
    #allocation2 [shape = 'u8[196608]{0}', space=vmem, size = 0x30000, scoped, tag = 'input window, operand 1, single buffered']
    #allocation3 [shape = 's32[2]{0}', space=sflag, size = 0x8, scoped, tag = 'scoped memory for tpu_custom_call.1']
    #allocation4 [shape = 's32[2]{0}', space=sflag, size = 0x8, scoped, tag = 'scoped memory for tpu_custom_call.1']
    #allocation5 [shape = 'u8[196608]{0}', space=vmem, size = 0x30000, scoped, tag = 'input window, operand 3, single buffered']
    #allocation6 [shape = 's32[1]{0}', space=sflag, size = 0x4, scoped, tag = 'scoped memory for tpu_custom_call.1']
    #allocation7 [shape = 'u8[16384]{0}', space=vmem, size = 0x4000, scoped, tag = 'output window, operand 0']
    %10 = vsyncpa [#allocation3], 0
    %11 = vsyncpa [#allocation6], 0
    %12 = vsyncpa [#allocation4], 0
    %s13 = scalar_lea.sflag [#allocation4], 1
    %14 = vsyncpa %s13, 0
    loop: start=0, step=1, limit=4
    $region2: #{tpu_custom_call.1} parent=1 // loop_pre_header
      _
    $region3: #{tpu_custom_call.1} parent=1 // loop_header
      %s16 = sphi 0, %s20
      %p17 = scmp.ge.s32.totalorder %s16, 4
      %s26 = sphi 0, %s28
      %s29 = sphi 0, %s26
      %s30 = sphi 0, %s29
      %s46 = sphi 0, %s30
      %s50 = sphi 0, %s50
      %s52 = sphi 0, %s50
      %s53 = sphi 0, %s52
      %s67 = sphi 0, %s53
      %s71 = sphi 0, %s71
      %s73 = sphi 0, %s71
      %s74 = sphi 0, %s73
      %s88 = sphi 0, %s74
      %s92 = sphi 0, %s92
      %s94 = sphi 0, %s92
      %s95 = sphi 0, %s94
      %s109 = sphi 0, %s95
      %s113 = sphi 0, %s113
      %s115 = sphi 0, %s113
      %s116 = sphi 0, %s115
      %s130 = sphi 0, %s116
      %s136 = sphi 0, %s138
      %s139 = sphi 0, %s136
      %s140 = sphi 0, %s139
      %s156 = sphi 0, %s140
    $region4: #{tpu_custom_call.1} parent=1 // loop_header_branch
      %19 = sbr.rel (%p17) target = $region8
    $region5: #{tpu_custom_call.1} parent=1 // loop_body
      %s21 = ssub.s32 %s16, 1
      %s22 = ssub.s32 %s16, 2
      %s23 = sadd.s32 %s16, 1
      %s24 = ssub.s32 %s16, %s23
      %p25 = scmp.eq.s32.totalorder %s24, 0
      %s27 = sadd.s32 %s26, 1
      %s28 = scalar_select %p25, %s26, %s27
      %p31 = pneg %p25
      %p32 = scmp.eq.s32.totalorder %s16, 1
      %p33 = por %p31, %p32
      %p34 = scmp.ne.s32.totalorder %s26, %s29
      %p35 = scmp.eq.s32.totalorder %s16, 0
      %p36 = por %p34, %p35
      %p37 = scmp.ne.s32.totalorder %s26, %s29
      %p38 = scmp.eq.s32.totalorder %s21, 1
      %p39 = por %p37, %p38
      %p40 = scmp.ne.s32.totalorder %s29, %s30
      %p41 = scmp.eq.s32.totalorder %s21, 0
      %p42 = por %p40, %p41
      %p43 = scmp.ne.s32.totalorder %s29, %s30
      %p44 = scmp.eq.s32.totalorder %s22, 1
      %p45 = por %p43, %p44
      %p47 = scmp.ne.s32.totalorder %s30, %s46
      %p48 = scmp.eq.s32.totalorder %s22, 0
      %p49 = por %p47, %p48
      %s51 = sadd.s32 %s50, 1
      %p54 = scmp.eq.s32.totalorder %s16, 1
      %p55 = scmp.ne.s32.totalorder %s50, %s52
      %p56 = scmp.eq.s32.totalorder %s16, 0
      %p57 = por %p55, %p56
      %p58 = scmp.ne.s32.totalorder %s50, %s52
      %p59 = scmp.eq.s32.totalorder %s21, 1
      %p60 = por %p58, %p59
      %p61 = scmp.ne.s32.totalorder %s52, %s53
      %p62 = scmp.eq.s32.totalorder %s21, 0
      %p63 = por %p61, %p62
      %p64 = scmp.ne.s32.totalorder %s52, %s53
      %p65 = scmp.eq.s32.totalorder %s22, 1
      %p66 = por %p64, %p65
      %p68 = scmp.ne.s32.totalorder %s53, %s67
      %p69 = scmp.eq.s32.totalorder %s22, 0
      %p70 = por %p68, %p69
      %s72 = sadd.s32 %s71, 1
      %p75 = scmp.eq.s32.totalorder %s16, 1
      %p76 = scmp.ne.s32.totalorder %s71, %s73
      %p77 = scmp.eq.s32.totalorder %s16, 0
      %p78 = por %p76, %p77
      %p79 = scmp.ne.s32.totalorder %s71, %s73
      %p80 = scmp.eq.s32.totalorder %s21, 1
      %p81 = por %p79, %p80
      %p82 = scmp.ne.s32.totalorder %s73, %s74
      %p83 = scmp.eq.s32.totalorder %s21, 0
      %p84 = por %p82, %p83
      %p85 = scmp.ne.s32.totalorder %s73, %s74
      %p86 = scmp.eq.s32.totalorder %s22, 1
      %p87 = por %p85, %p86
      %p89 = scmp.ne.s32.totalorder %s74, %s88
      %p90 = scmp.eq.s32.totalorder %s22, 0
      %p91 = por %p89, %p90
      %s93 = sadd.s32 %s92, 1
      %p96 = scmp.eq.s32.totalorder %s16, 1
      %p97 = scmp.ne.s32.totalorder %s92, %s94
      %p98 = scmp.eq.s32.totalorder %s16, 0
      %p99 = por %p97, %p98
      %p100 = scmp.ne.s32.totalorder %s92, %s94
      %p101 = scmp.eq.s32.totalorder %s21, 1
      %p102 = por %p100, %p101
      %p103 = scmp.ne.s32.totalorder %s94, %s95
      %p104 = scmp.eq.s32.totalorder %s21, 0
      %p105 = por %p103, %p104
      %p106 = scmp.ne.s32.totalorder %s94, %s95
      %p107 = scmp.eq.s32.totalorder %s22, 1
      %p108 = por %p106, %p107
      %p110 = scmp.ne.s32.totalorder %s95, %s109
      %p111 = scmp.eq.s32.totalorder %s22, 0
      %p112 = por %p110, %p111
      %s114 = sadd.s32 %s113, 1
      %p117 = scmp.eq.s32.totalorder %s16, 1
      %p118 = scmp.ne.s32.totalorder %s113, %s115
      %p119 = scmp.eq.s32.totalorder %s16, 0
      %p120 = por %p118, %p119
      %p121 = scmp.ne.s32.totalorder %s113, %s115
      %p122 = scmp.eq.s32.totalorder %s21, 1
      %p123 = por %p121, %p122
      %p124 = scmp.ne.s32.totalorder %s115, %s116
      %p125 = scmp.eq.s32.totalorder %s21, 0
      %p126 = por %p124, %p125
      %p127 = scmp.ne.s32.totalorder %s115, %s116
      %p128 = scmp.eq.s32.totalorder %s22, 1
      %p129 = por %p127, %p128
      %p131 = scmp.ne.s32.totalorder %s116, %s130
      %p132 = scmp.eq.s32.totalorder %s22, 0
      %p133 = por %p131, %p132
      %s134 = ssub.s32 %s16, %s23
      %p135 = scmp.eq.s32.totalorder %s134, 0
      %s137 = sadd.s32 %s136, 1
      %s138 = scalar_select %p135, %s136, %s137
      %p141 = pneg %p135
      %p142 = scmp.eq.s32.totalorder %s16, 1
      %p143 = por %p141, %p142
      %p144 = scmp.ne.s32.totalorder %s136, %s139
      %p145 = scmp.eq.s32.totalorder %s16, 0
      %p146 = por %p144, %p145
      %p147 = scmp.ne.s32.totalorder %s136, %s139
      %p148 = scmp.eq.s32.totalorder %s21, 1
      %p149 = por %p147, %p148
      %p150 = scmp.ne.s32.totalorder %s139, %s140
      %p151 = scmp.eq.s32.totalorder %s21, 0
      %p152 = por %p150, %p151
      %p153 = scmp.ne.s32.totalorder %s139, %s140
      %p154 = scmp.eq.s32.totalorder %s22, 1
      %p155 = por %p153, %p154
      %p157 = scmp.ne.s32.totalorder %s140, %s156
      %p158 = scmp.eq.s32.totalorder %s22, 0
      %p159 = por %p157, %p158
      %p160 = scmp.le.s32.totalorder 1, %s16
      %p161 = scmp.lt.s32.totalorder %s16, 3
      %p162 = pnand %p160, %p161
      %p163 = pneg %p162
      // Predicated region
      $region9: #{tpu_custom_call.1} parent=5 // pred_check
        _
      $region10: #{tpu_custom_call.1} parent=5 // pred_check_branch
        %165 = sbr.rel (%p162) target = $region12
      $region11: #{tpu_custom_call.1} parent=5 // pred_region
        %s166 = ssub.s32 %s16, 1
        // Predicated region
        $region13: #{tpu_custom_call.1} parent=11 // pred_check
          %p167 = pneg %p63
        $region14: #{tpu_custom_call.1} parent=11 // pred_check_branch
          %169 = sbr.rel (%p167) target = $region16
        $region15: #{tpu_custom_call.1} parent=11 // pred_region
          %s171 = ssub.s32 6144, 6144
          %172 = vsyncadd [#allocation3], %s171
          %s173 = sshll.u32 [#allocation2], 4
          %s174 = int_to_ptr.vmem [resolvable:$true] %s173
          %179 = dma.hbm_to_vmem [thread:$0]  %s1, 6144, %s174, [#allocation3], 128, 128, 8
        $region16: #{tpu_custom_call.1} parent=11 // pred_fallthru
          _
        // Predicated region
        $region17: #{tpu_custom_call.1} parent=11 // pred_check
          %p180 = pneg %p84
        $region18: #{tpu_custom_call.1} parent=11 // pred_check_branch
          %182 = sbr.rel (%p180) target = $region20
        $region19: #{tpu_custom_call.1} parent=11 // pred_region
          _
        $region20: #{tpu_custom_call.1} parent=11 // pred_fallthru
          _
        // Predicated region
        $region21: #{tpu_custom_call.1} parent=11 // pred_check
          %p183 = pneg %p105
        $region22: #{tpu_custom_call.1} parent=11 // pred_check_branch
          %185 = sbr.rel (%p183) target = $region24
        $region23: #{tpu_custom_call.1} parent=11 // pred_region
          %s187 = ssub.s32 6144, 6144
          %188 = vsyncadd [#allocation6], %s187
          %s189 = sshll.u32 [#allocation5], 4
          %s190 = int_to_ptr.vmem [resolvable:$true] %s189
          %195 = dma.hbm_to_vmem [thread:$0]  %s3, 6144, %s190, [#allocation6], 128, 128, 8
        $region24: #{tpu_custom_call.1} parent=11 // pred_fallthru
          _
        // Predicated region
        $region25: #{tpu_custom_call.1} parent=11 // pred_check
          %p196 = pneg %p126
        $region26: #{tpu_custom_call.1} parent=11 // pred_check_branch
          %198 = sbr.rel (%p196) target = $region28
        $region27: #{tpu_custom_call.1} parent=11 // pred_region
          _
        $region28: #{tpu_custom_call.1} parent=11 // pred_fallthru
          _
      $region12: #{tpu_custom_call.1} parent=5 // pred_fallthru
        _
      %p199 = scmp.lt.s32.totalorder %s16, 2
      // Predicated region
      $region29: #{tpu_custom_call.1} parent=5 // pred_check
        %p200 = pneg %p199
      $region30: #{tpu_custom_call.1} parent=5 // pred_check_branch
        %202 = sbr.rel (%p200) target = $region32
      $region31: #{tpu_custom_call.1} parent=5 // pred_region
        // Predicated region
        $region33: #{tpu_custom_call.1} parent=31 // pred_check
          %p203 = pneg %p36
        $region34: #{tpu_custom_call.1} parent=31 // pred_check_branch
          %205 = sbr.rel (%p203) target = $region36
        $region35: #{tpu_custom_call.1} parent=31 // pred_region
          %p206 = scmp.lt.s32.totalorder %s16, 1
          %s207 = scalar_select %p206, %s16, 1
          %s208 = smul.addr %s207, 3
          %s209 = smul.addr %s208, 8
          %s210 = scalar_lea.vmem %s0, %s209
        $region36: #{tpu_custom_call.1} parent=31 // pred_fallthru
          _
      $region32: #{tpu_custom_call.1} parent=5 // pred_fallthru
        _
      %p211 = scmp.le.s32.totalorder 1, %s16
      %p212 = scmp.lt.s32.totalorder %s16, 3
      %p213 = pnand %p211, %p212
      %p214 = pneg %p213
      // Predicated region
      $region37: #{tpu_custom_call.1} parent=5 // pred_check
        _
      $region38: #{tpu_custom_call.1} parent=5 // pred_check_branch
        %216 = sbr.rel (%p213) target = $region40
      $region39: #{tpu_custom_call.1} parent=5 // pred_region
        %s217 = ssub.s32 %s16, 1
        // Predicated region
        $region41: #{tpu_custom_call.1} parent=39 // pred_check
          %p218 = pneg %p63
        $region42: #{tpu_custom_call.1} parent=39 // pred_check_branch
          %220 = sbr.rel (%p218) target = $region44
        $region43: #{tpu_custom_call.1} parent=39 // pred_region
          %221 = dma.done [#allocation3], 6144
        $region44: #{tpu_custom_call.1} parent=39 // pred_fallthru
          _
        // Predicated region
        $region45: #{tpu_custom_call.1} parent=39 // pred_check
          %p222 = pneg %p105
        $region46: #{tpu_custom_call.1} parent=39 // pred_check_branch
          %224 = sbr.rel (%p222) target = $region48
        $region47: #{tpu_custom_call.1} parent=39 // pred_region
          %225 = dma.done [#allocation6], 6144
        $region48: #{tpu_custom_call.1} parent=39 // pred_fallthru
          _
        %p226 = scmp.lt.s32.totalorder %s21, 1
        %s227 = scalar_select %p226, %s21, 1
        %s228 = smul.addr %s227, 3
        %s229 = smul.addr %s228, 8
        %s230 = scalar_lea.vmem %s0, %s229
        %p231 = pneg %p42
        %p232 = pneg %p39
        %p233 = pneg %p63
        %p234 = pneg %p60
        %p235 = pneg %p84
        %p236 = pneg %p81
        %p237 = pneg %p105
        %p238 = pneg %p102
        %p239 = pneg %p126
        %p240 = pneg %p123
        %p241 = pneg %p152
        %p242 = pneg %p149
        %s243 = sand.u32 %s139, 1
        %s244 = scalar_lea.sflag [#allocation4], %s243
        %s245 = sand.u32 %s139, 1
        %s246 = smul.addr %s245, 16
        %s247 = scalar_lea.vmem [#allocation7], %s246
        %p248 = scmp.lt.s32.totalorder %s21, 1
        %s249 = scalar_select %p248, %s21, 1
        %s250 = smul.addr %s249, 3
        %s251 = smul.addr %s250, 8
        %s252 = scalar_lea.vmem %s0, %s251
        %v253 = vld [vmem:[%s252] sm:$0xff]
        %v254 = vld [vmem:[%s252 + $0x8] sm:$0xff]
        %v255 = vld [vmem:[%s252 + $0x10] sm:$0xf]
        %vm259 = vcmask 1046528
        %v260 = vrot.slane %v253, 1
        %v261 = vrot.slane %v254, 1
        %v262 = vsel %vm259, %v260, %v261
        %v263 = vrot.slane %v255, 1
        %v264 = vsel %vm259, %v261, %v263
        %vm268 = vcmask 1045504
        %v269 = vrot.slane %v253, 2
        %v270 = vrot.slane %v254, 2
        %v271 = vsel %vm268, %v269, %v270
        %v272 = vrot.slane %v255, 2
        %v273 = vsel %vm268, %v270, %v272
        %v277 = vld [vmem:[#allocation2] sm:$0xff]
        %v278 = vld [vmem:[#allocation2 + $0x8] sm:$0xff]
        %v279 = vld [vmem:[#allocation2 + $0x10] sm:$0xff]
        %v280 = vld [vmem:[#allocation2 + $0x18] sm:$0xff]
        %v281 = vld [vmem:[#allocation2 + $0x20] sm:$0xff]
        %v282 = vld [vmem:[#allocation2 + $0x28] sm:$0xff]
        %v283 = vld [vmem:[#allocation2 + $0x30] sm:$0xff]
        %v284 = vld [vmem:[#allocation2 + $0x38] sm:$0xff]
        %v285 = vld [vmem:[#allocation2 + $0x40] sm:$0xff]
        %v286 = vld [vmem:[#allocation2 + $0x48] sm:$0xff]
        %v287 = vld [vmem:[#allocation2 + $0x50] sm:$0xff]
        %v288 = vld [vmem:[#allocation2 + $0x58] sm:$0xff]
        %v289 = vld [vmem:[#allocation2 + $0x60] sm:$0xff]
        %v290 = vld [vmem:[#allocation2 + $0x68] sm:$0xff]
        %v291 = vld [vmem:[#allocation2 + $0x70] sm:$0xff]
        %v292 = vld [vmem:[#allocation2 + $0x78] sm:$0xff]
        %v293 = vld [vmem:[#allocation2 + $0x80] sm:$0xff]
        %v294 = vld [vmem:[#allocation2 + $0x88] sm:$0xff]
        %v295 = vld [vmem:[#allocation2 + $0x90] sm:$0xff]
        %v296 = vld [vmem:[#allocation2 + $0x98] sm:$0xff]
        %v297 = vld [vmem:[#allocation2 + $0xa0] sm:$0xff]
        %v298 = vld [vmem:[#allocation2 + $0xa8] sm:$0xff]
        %v299 = vld [vmem:[#allocation2 + $0xb0] sm:$0xff]
        %v300 = vld [vmem:[#allocation2 + $0xb8] sm:$0xff]
        %v301 = vld [vmem:[#allocation2 + $0xc0] sm:$0xff]
        %v302 = vld [vmem:[#allocation2 + $0xc8] sm:$0xff]
        %v303 = vld [vmem:[#allocation2 + $0xd0] sm:$0xff]
        %v304 = vld [vmem:[#allocation2 + $0xd8] sm:$0xff]
        %v305 = vld [vmem:[#allocation2 + $0xe0] sm:$0xff]
        %v306 = vld [vmem:[#allocation2 + $0xe8] sm:$0xff]
        %v307 = vld [vmem:[#allocation2 + $0xf0] sm:$0xff]
        %v308 = vld [vmem:[#allocation2 + $0xf8] sm:$0xff]
        %v309 = vld [vmem:[#allocation2 + $0x100] sm:$0xff]
        %v310 = vld [vmem:[#allocation2 + $0x108] sm:$0xff]
        %v311 = vld [vmem:[#allocation2 + $0x110] sm:$0xff]
        %v312 = vld [vmem:[#allocation2 + $0x118] sm:$0xff]
        %v313 = vld [vmem:[#allocation2 + $0x120] sm:$0xff]
        %v314 = vld [vmem:[#allocation2 + $0x128] sm:$0xff]
        %v315 = vld [vmem:[#allocation2 + $0x130] sm:$0xff]
        %v316 = vld [vmem:[#allocation2 + $0x138] sm:$0xff]
        %v317 = vld [vmem:[#allocation2 + $0x140] sm:$0xff]
        %v318 = vld [vmem:[#allocation2 + $0x148] sm:$0xff]
        %v319 = vld [vmem:[#allocation2 + $0x150] sm:$0xff]
        %v320 = vld [vmem:[#allocation2 + $0x158] sm:$0xff]
        %v321 = vld [vmem:[#allocation2 + $0x160] sm:$0xff]
        %v322 = vld [vmem:[#allocation2 + $0x168] sm:$0xff]
        %v323 = vld [vmem:[#allocation2 + $0x170] sm:$0xff]
        %v324 = vld [vmem:[#allocation2 + $0x178] sm:$0xff]
        %v325 = vld [vmem:[%s2] sm:$0x1]
        %v327 = vlaneseq
        %v328 = vshrl.u32 %v327, 7
        %v329 = vsub.s32 0, %v328
        %v330 = vrot.slane %v325, %v329
        %332 = vmatprep.subr.mxu0 0.0
        %333 = vmatpush1.msra.mxu0 %v277
        %334 = vmatprep.subr.mxu0 0.0
        %335 = vmatpush1.msra.mxu0 %v278
        %336 = vmatprep.subr.mxu0 0.0
        %337 = vmatpush1.msra.mxu0 %v279
        %338 = vmatprep.subr.mxu0 0.0
        %339 = vmatpush1.msra.mxu0 %v280
        %340 = vmatprep.subr.mxu0 0.0
        %341 = vmatpush1.msra.mxu0 %v281
        %342 = vmatprep.subr.mxu0 0.0
        %343 = vmatpush1.msra.mxu0 %v282
        %344 = vmatprep.subr.mxu0 0.0
        %345 = vmatpush1.msra.mxu0 %v283
        %346 = vmatprep.subr.mxu0 0.0
        %347 = vmatpush1.msra.mxu0 %v284
        %348 = vmatprep.subr.mxu0 0.0
        %349 = vmatpush1.msra.mxu0 %v285
        %350 = vmatprep.subr.mxu0 0.0
        %351 = vmatpush1.msra.mxu0 %v286
        %352 = vmatprep.subr.mxu0 0.0
        %353 = vmatpush1.msra.mxu0 %v287
        %354 = vmatprep.subr.mxu0 0.0
        %355 = vmatpush1.msra.mxu0 %v288
        %356 = vmatprep.subr.mxu0 0.0
        %357 = vmatpush1.msra.mxu0 %v289
        %358 = vmatprep.subr.mxu0 0.0
        %359 = vmatpush1.msra.mxu0 %v290
        %360 = vmatprep.subr.mxu0 0.0
        %361 = vmatpush1.msra.mxu0 %v291
        %362 = vmatprep.subr.mxu0 0.0
        %363 = vmatpush1.msra.mxu0 %v292
        %364 = vmatprep.subr.mxu0 0.0
        %365 = vmatpush1.msra.mxu0 %v293
        %366 = vmatprep.subr.mxu0 0.0
        %367 = vmatpush1.msra.mxu0 %v294
        %368 = vmatprep.subr.mxu0 0.0
        %369 = vmatpush1.msra.mxu0 %v295
        %370 = vmatprep.subr.mxu0 0.0
        %371 = vmatpush1.msra.mxu0 %v296
        %372 = vmatprep.subr.mxu0 0.0
        %373 = vmatpush1.msra.mxu0 %v297
        %374 = vmatprep.subr.mxu0 0.0
        %375 = vmatpush1.msra.mxu0 %v298
        %376 = vmatprep.subr.mxu0 0.0
        %377 = vmatpush1.msra.mxu0 %v299
        %378 = vmatprep.subr.mxu0 0.0
        %379 = vmatpush1.msra.mxu0 %v300
        %380 = vmatprep.subr.mxu0 0.0
        %381 = vmatpush1.msra.mxu0 %v301
        %382 = vmatprep.subr.mxu0 0.0
        %383 = vmatpush1.msra.mxu0 %v302
        %384 = vmatprep.subr.mxu0 0.0
        %385 = vmatpush1.msra.mxu0 %v303
        %386 = vmatprep.subr.mxu0 0.0
        %387 = vmatpush1.msra.mxu0 %v304
        %388 = vmatprep.subr.mxu0 0.0
        %389 = vmatpush1.msra.mxu0 %v305
        %390 = vmatprep.subr.mxu0 0.0
        %391 = vmatpush1.msra.mxu0 %v306
        %392 = vmatprep.subr.mxu0 0.0
        %393 = vmatpush1.msra.mxu0 %v307
        %394 = vmatprep.subr.mxu0 0.0
        %395 = vmatpush1.msra.mxu0 %v308
        %396 = vmatprep.mubr.f32.mxu0 %v262
        %397 = vmatmul.mubr.f32.gmra.mrb[0].mxu0 %v253
        %v398 = vpop.f32.mrb[0].mxu0
        %v399 = vadd.f32 %v330, %v398
        %v400 = vpop.f32.mrb[0].mxu0
        %401 = vmatprep.mubr.f32.mxu0 %v264
        %402 = vmatmul.mubr.f32.gmra.mrb[0].mxu0 %v254
        %v403 = vpop.f32.mrb[0].mxu0
        %v404 = vadd.f32 %v330, %v403
        %v405 = vpop.f32.mrb[0].mxu0
        %406 = vmatprep.mubr.f32.mxu0 %v263
        %407 = vmatmul.mubr.f32.gmra.mrb[0].mxu0 %v255
        %v408 = vpop.f32.mrb[0].mxu0
        %v409 = vadd.f32 %v330, %v408
        %v410 = vpop.f32.mrb[0].mxu0
        %411 = vdwg.mxu0
        %412 = vmatprep.subr.mxu0 0.0
        %413 = vmatpush1.msra.mxu0 %v309
        %414 = vmatprep.subr.mxu0 0.0
        %415 = vmatpush1.msra.mxu0 %v310
        %416 = vmatprep.subr.mxu0 0.0
        %417 = vmatpush1.msra.mxu0 %v311
        %418 = vmatprep.subr.mxu0 0.0
        %419 = vmatpush1.msra.mxu0 %v312
        %420 = vmatprep.subr.mxu0 0.0
        %421 = vmatpush1.msra.mxu0 %v313
        %422 = vmatprep.subr.mxu0 0.0
        %423 = vmatpush1.msra.mxu0 %v314
        %424 = vmatprep.subr.mxu0 0.0
        %425 = vmatpush1.msra.mxu0 %v315
        %426 = vmatprep.subr.mxu0 0.0
        %427 = vmatpush1.msra.mxu0 %v316
        %428 = vmatprep.subr.mxu0 0.0
        %429 = vmatpush1.msra.mxu0 %v317
        %430 = vmatprep.subr.mxu0 0.0
        %431 = vmatpush1.msra.mxu0 %v318
        %432 = vmatprep.subr.mxu0 0.0
        %433 = vmatpush1.msra.mxu0 %v319
        %434 = vmatprep.subr.mxu0 0.0
        %435 = vmatpush1.msra.mxu0 %v320
        %436 = vmatprep.subr.mxu0 0.0
        %437 = vmatpush1.msra.mxu0 %v321
        %438 = vmatprep.subr.mxu0 0.0
        %439 = vmatpush1.msra.mxu0 %v322
        %440 = vmatprep.subr.mxu0 0.0
        %441 = vmatpush1.msra.mxu0 %v323
        %442 = vmatprep.subr.mxu0 0.0
        %443 = vmatpush1.msra.mxu0 %v324
        %444 = vmatprep.subr.mxu0 0.0
        %445 = vmatpush1.msra.mxu0 0.0
        %446 = vmatprep.subr.mxu0 0.0
        %447 = vmatpush1.msra.mxu0 0.0
        %448 = vmatprep.subr.mxu0 0.0
        %449 = vmatpush1.msra.mxu0 0.0
        %450 = vmatprep.subr.mxu0 0.0
        %451 = vmatpush1.msra.mxu0 0.0
        %452 = vmatprep.subr.mxu0 0.0
        %453 = vmatpush1.msra.mxu0 0.0
        %454 = vmatprep.subr.mxu0 0.0
        %455 = vmatpush1.msra.mxu0 0.0
        %456 = vmatprep.subr.mxu0 0.0
        %457 = vmatpush1.msra.mxu0 0.0
        %458 = vmatprep.subr.mxu0 0.0
        %459 = vmatpush1.msra.mxu0 0.0
        %460 = vmatprep.subr.mxu0 0.0
        %461 = vmatpush1.msra.mxu0 0.0
        %462 = vmatprep.subr.mxu0 0.0
        %463 = vmatpush1.msra.mxu0 0.0
        %464 = vmatprep.subr.mxu0 0.0
        %465 = vmatpush1.msra.mxu0 0.0
        %466 = vmatprep.subr.mxu0 0.0
        %467 = vmatpush1.msra.mxu0 0.0
        %468 = vmatprep.subr.mxu0 0.0
        %469 = vmatpush1.msra.mxu0 0.0
        %470 = vmatprep.subr.mxu0 0.0
        %471 = vmatpush1.msra.mxu0 0.0
        %472 = vmatprep.subr.mxu0 0.0
        %473 = vmatpush1.msra.mxu0 0.0
        %474 = vmatprep.subr.mxu0 0.0
        %475 = vmatpush1.msra.mxu0 0.0
        %476 = vmatprep.mubr.f32.mxu0 0.0
        %477 = vmatmul.mubr.f32.gmra.mrb[0].mxu0 %v271
        %v478 = vpop.f32.mrb[0].mxu0
        %v479 = vadd.f32 %v399, %v478
        %v480 = vpop.f32.mrb[0].mxu0
        %481 = vmatprep.mubr.f32.mxu0 0.0
        %482 = vmatmul.mubr.f32.gmra.mrb[0].mxu0 %v273
        %v483 = vpop.f32.mrb[0].mxu0
        %v484 = vadd.f32 %v404, %v483
        %v485 = vpop.f32.mrb[0].mxu0
        %486 = vmatprep.mubr.f32.mxu0 0.0
        %487 = vmatmul.mubr.f32.gmra.mrb[0].mxu0 %v272
        %v488 = vpop.f32.mrb[0].mxu0
        %v489 = vadd.f32 %v409, %v488
        %v490 = vpop.f32.mrb[0].mxu0
        %491 = vdwg.mxu0
        %v492 = vmax.f32 %v479, 0.0
        %v493 = vmax.f32 %v484, 0.0
        %v494 = vmax.f32 %v489, 0.0
        %v495 = vlaneseq
        %v496 = vshrl.u32 %v495, 7
        %v497 = vadd.s32 %v496, 8
        %v498 = vadd.s32 %v496, 16
        %vm499 = vcmp.ge.s32.totalorder %v496, 1
        %vm500 = vcmp.ge.s32.totalorder %v497, 1
        %vm501 = vcmp.ge.s32.totalorder %v498, 1
        %vm502 = vcmp.lt.s32.totalorder %v496, 17
        %vm503 = vcmp.lt.s32.totalorder %v497, 17
        %vm504 = vcmp.lt.s32.totalorder %v498, 17
        %vm505 = vmand %vm499, %vm502
        %vm506 = vmand %vm500, %vm503
        %vm507 = vmand %vm501, %vm504
        %v508 = vsel %vm505, %v492, 0.0
        %v509 = vsel %vm506, %v493, 0.0
        %v510 = vsel %vm507, %v494, 0.0
        %v514 = vrot.slane %v508, 1
        %v515 = vrot.slane %v509, 1
        %v516 = vsel %vm259, %v514, %v515
        %v517 = vrot.slane %v510, 1
        %v518 = vsel %vm259, %v515, %v517
        %v521 = vrot.slane %v508, 2
        %v522 = vrot.slane %v509, 2
        %v523 = vsel %vm268, %v521, %v522
        %v524 = vrot.slane %v510, 2
        %v525 = vsel %vm268, %v522, %v524
        %v528 = vld [vmem:[#allocation5] sm:$0xff]
        %v529 = vld [vmem:[#allocation5 + $0x8] sm:$0xff]
        %v530 = vld [vmem:[#allocation5 + $0x10] sm:$0xff]
        %v531 = vld [vmem:[#allocation5 + $0x18] sm:$0xff]
        %v532 = vld [vmem:[#allocation5 + $0x20] sm:$0xff]
        %v533 = vld [vmem:[#allocation5 + $0x28] sm:$0xff]
        %v534 = vld [vmem:[#allocation5 + $0x30] sm:$0xff]
        %v535 = vld [vmem:[#allocation5 + $0x38] sm:$0xff]
        %v536 = vld [vmem:[#allocation5 + $0x40] sm:$0xff]
        %v537 = vld [vmem:[#allocation5 + $0x48] sm:$0xff]
        %v538 = vld [vmem:[#allocation5 + $0x50] sm:$0xff]
        %v539 = vld [vmem:[#allocation5 + $0x58] sm:$0xff]
        %v540 = vld [vmem:[#allocation5 + $0x60] sm:$0xff]
        %v541 = vld [vmem:[#allocation5 + $0x68] sm:$0xff]
        %v542 = vld [vmem:[#allocation5 + $0x70] sm:$0xff]
        %v543 = vld [vmem:[#allocation5 + $0x78] sm:$0xff]
        %v544 = vld [vmem:[#allocation5 + $0x80] sm:$0xff]
        %v545 = vld [vmem:[#allocation5 + $0x88] sm:$0xff]
        %v546 = vld [vmem:[#allocation5 + $0x90] sm:$0xff]
        %v547 = vld [vmem:[#allocation5 + $0x98] sm:$0xff]
        %v548 = vld [vmem:[#allocation5 + $0xa0] sm:$0xff]
        %v549 = vld [vmem:[#allocation5 + $0xa8] sm:$0xff]
        %v550 = vld [vmem:[#allocation5 + $0xb0] sm:$0xff]
        %v551 = vld [vmem:[#allocation5 + $0xb8] sm:$0xff]
        %v552 = vld [vmem:[#allocation5 + $0xc0] sm:$0xff]
        %v553 = vld [vmem:[#allocation5 + $0xc8] sm:$0xff]
        %v554 = vld [vmem:[#allocation5 + $0xd0] sm:$0xff]
        %v555 = vld [vmem:[#allocation5 + $0xd8] sm:$0xff]
        %v556 = vld [vmem:[#allocation5 + $0xe0] sm:$0xff]
        %v557 = vld [vmem:[#allocation5 + $0xe8] sm:$0xff]
        %v558 = vld [vmem:[#allocation5 + $0xf0] sm:$0xff]
        %v559 = vld [vmem:[#allocation5 + $0xf8] sm:$0xff]
        %v560 = vld [vmem:[#allocation5 + $0x100] sm:$0xff]
        %v561 = vld [vmem:[#allocation5 + $0x108] sm:$0xff]
        %v562 = vld [vmem:[#allocation5 + $0x110] sm:$0xff]
        %v563 = vld [vmem:[#allocation5 + $0x118] sm:$0xff]
        %v564 = vld [vmem:[#allocation5 + $0x120] sm:$0xff]
        %v565 = vld [vmem:[#allocation5 + $0x128] sm:$0xff]
        %v566 = vld [vmem:[#allocation5 + $0x130] sm:$0xff]
        %v567 = vld [vmem:[#allocation5 + $0x138] sm:$0xff]
        %v568 = vld [vmem:[#allocation5 + $0x140] sm:$0xff]
        %v569 = vld [vmem:[#allocation5 + $0x148] sm:$0xff]
        %v570 = vld [vmem:[#allocation5 + $0x150] sm:$0xff]
        %v571 = vld [vmem:[#allocation5 + $0x158] sm:$0xff]
        %v572 = vld [vmem:[#allocation5 + $0x160] sm:$0xff]
        %v573 = vld [vmem:[#allocation5 + $0x168] sm:$0xff]
        %v574 = vld [vmem:[#allocation5 + $0x170] sm:$0xff]
        %v575 = vld [vmem:[#allocation5 + $0x178] sm:$0xff]
        %v576 = vld [vmem:[%s4] sm:$0x1]
        %v578 = vlaneseq
        %v579 = vshrl.u32 %v578, 7
        %v580 = vsub.s32 0, %v579
        %v581 = vrot.slane %v576, %v580
        %583 = vmatprep.subr.mxu0 0.0
        %584 = vmatpush1.msra.mxu0 %v528
        %585 = vmatprep.subr.mxu0 0.0
        %586 = vmatpush1.msra.mxu0 %v529
        %587 = vmatprep.subr.mxu0 0.0
        %588 = vmatpush1.msra.mxu0 %v530
        %589 = vmatprep.subr.mxu0 0.0
        %590 = vmatpush1.msra.mxu0 %v531
        %591 = vmatprep.subr.mxu0 0.0
        %592 = vmatpush1.msra.mxu0 %v532
        %593 = vmatprep.subr.mxu0 0.0
        %594 = vmatpush1.msra.mxu0 %v533
        %595 = vmatprep.subr.mxu0 0.0
        %596 = vmatpush1.msra.mxu0 %v534
        %597 = vmatprep.subr.mxu0 0.0
        %598 = vmatpush1.msra.mxu0 %v535
        %599 = vmatprep.subr.mxu0 0.0
        %600 = vmatpush1.msra.mxu0 %v536
        %601 = vmatprep.subr.mxu0 0.0
        %602 = vmatpush1.msra.mxu0 %v537
        %603 = vmatprep.subr.mxu0 0.0
        %604 = vmatpush1.msra.mxu0 %v538
        %605 = vmatprep.subr.mxu0 0.0
        %606 = vmatpush1.msra.mxu0 %v539
        %607 = vmatprep.subr.mxu0 0.0
        %608 = vmatpush1.msra.mxu0 %v540
        %609 = vmatprep.subr.mxu0 0.0
        %610 = vmatpush1.msra.mxu0 %v541
        %611 = vmatprep.subr.mxu0 0.0
        %612 = vmatpush1.msra.mxu0 %v542
        %613 = vmatprep.subr.mxu0 0.0
        %614 = vmatpush1.msra.mxu0 %v543
        %615 = vmatprep.subr.mxu0 0.0
        %616 = vmatpush1.msra.mxu0 %v544
        %617 = vmatprep.subr.mxu0 0.0
        %618 = vmatpush1.msra.mxu0 %v545
        %619 = vmatprep.subr.mxu0 0.0
        %620 = vmatpush1.msra.mxu0 %v546
        %621 = vmatprep.subr.mxu0 0.0
        %622 = vmatpush1.msra.mxu0 %v547
        %623 = vmatprep.subr.mxu0 0.0
        %624 = vmatpush1.msra.mxu0 %v548
        %625 = vmatprep.subr.mxu0 0.0
        %626 = vmatpush1.msra.mxu0 %v549
        %627 = vmatprep.subr.mxu0 0.0
        %628 = vmatpush1.msra.mxu0 %v550
        %629 = vmatprep.subr.mxu0 0.0
        %630 = vmatpush1.msra.mxu0 %v551
        %631 = vmatprep.subr.mxu0 0.0
        %632 = vmatpush1.msra.mxu0 %v552
        %633 = vmatprep.subr.mxu0 0.0
        %634 = vmatpush1.msra.mxu0 %v553
        %635 = vmatprep.subr.mxu0 0.0
        %636 = vmatpush1.msra.mxu0 %v554
        %637 = vmatprep.subr.mxu0 0.0
        %638 = vmatpush1.msra.mxu0 %v555
        %639 = vmatprep.subr.mxu0 0.0
        %640 = vmatpush1.msra.mxu0 %v556
        %641 = vmatprep.subr.mxu0 0.0
        %642 = vmatpush1.msra.mxu0 %v557
        %643 = vmatprep.subr.mxu0 0.0
        %644 = vmatpush1.msra.mxu0 %v558
        %645 = vmatprep.subr.mxu0 0.0
        %646 = vmatpush1.msra.mxu0 %v559
        %647 = vmatprep.mubr.f32.mxu0 %v516
        %648 = vmatmul.mubr.f32.gmra.mrb[0].mxu0 %v508
        %v649 = vpop.f32.mrb[0].mxu0
        %v650 = vadd.f32 %v581, %v649
        %v651 = vpop.f32.mrb[0].mxu0
        %652 = vmatprep.mubr.f32.mxu0 %v518
        %653 = vmatmul.mubr.f32.gmra.mrb[0].mxu0 %v509
        %v654 = vpop.f32.mrb[0].mxu0
        %v655 = vadd.f32 %v581, %v654
        %v656 = vpop.f32.mrb[0].mxu0
        %657 = vdwg.mxu0
        %658 = vmatprep.subr.mxu0 0.0
        %659 = vmatpush1.msra.mxu0 %v560
        %660 = vmatprep.subr.mxu0 0.0
        %661 = vmatpush1.msra.mxu0 %v561
        %662 = vmatprep.subr.mxu0 0.0
        %663 = vmatpush1.msra.mxu0 %v562
        %664 = vmatprep.subr.mxu0 0.0
        %665 = vmatpush1.msra.mxu0 %v563
        %666 = vmatprep.subr.mxu0 0.0
        %667 = vmatpush1.msra.mxu0 %v564
        %668 = vmatprep.subr.mxu0 0.0
        %669 = vmatpush1.msra.mxu0 %v565
        %670 = vmatprep.subr.mxu0 0.0
        %671 = vmatpush1.msra.mxu0 %v566
        %672 = vmatprep.subr.mxu0 0.0
        %673 = vmatpush1.msra.mxu0 %v567
        %674 = vmatprep.subr.mxu0 0.0
        %675 = vmatpush1.msra.mxu0 %v568
        %676 = vmatprep.subr.mxu0 0.0
        %677 = vmatpush1.msra.mxu0 %v569
        %678 = vmatprep.subr.mxu0 0.0
        %679 = vmatpush1.msra.mxu0 %v570
        %680 = vmatprep.subr.mxu0 0.0
        %681 = vmatpush1.msra.mxu0 %v571
        %682 = vmatprep.subr.mxu0 0.0
        %683 = vmatpush1.msra.mxu0 %v572
        %684 = vmatprep.subr.mxu0 0.0
        %685 = vmatpush1.msra.mxu0 %v573
        %686 = vmatprep.subr.mxu0 0.0
        %687 = vmatpush1.msra.mxu0 %v574
        %688 = vmatprep.subr.mxu0 0.0
        %689 = vmatpush1.msra.mxu0 %v575
        %690 = vmatprep.subr.mxu0 0.0
        %691 = vmatpush1.msra.mxu0 0.0
        %692 = vmatprep.subr.mxu0 0.0
        %693 = vmatpush1.msra.mxu0 0.0
        %694 = vmatprep.subr.mxu0 0.0
        %695 = vmatpush1.msra.mxu0 0.0
        %696 = vmatprep.subr.mxu0 0.0
        %697 = vmatpush1.msra.mxu0 0.0
        %698 = vmatprep.subr.mxu0 0.0
        %699 = vmatpush1.msra.mxu0 0.0
        %700 = vmatprep.subr.mxu0 0.0
        %701 = vmatpush1.msra.mxu0 0.0
        %702 = vmatprep.subr.mxu0 0.0
        %703 = vmatpush1.msra.mxu0 0.0
        %704 = vmatprep.subr.mxu0 0.0
        %705 = vmatpush1.msra.mxu0 0.0
        %706 = vmatprep.subr.mxu0 0.0
        %707 = vmatpush1.msra.mxu0 0.0
        %708 = vmatprep.subr.mxu0 0.0
        %709 = vmatpush1.msra.mxu0 0.0
        %710 = vmatprep.subr.mxu0 0.0
        %711 = vmatpush1.msra.mxu0 0.0
        %712 = vmatprep.subr.mxu0 0.0
        %713 = vmatpush1.msra.mxu0 0.0
        %714 = vmatprep.subr.mxu0 0.0
        %715 = vmatpush1.msra.mxu0 0.0
        %716 = vmatprep.subr.mxu0 0.0
        %717 = vmatpush1.msra.mxu0 0.0
        %718 = vmatprep.subr.mxu0 0.0
        %719 = vmatpush1.msra.mxu0 0.0
        %720 = vmatprep.subr.mxu0 0.0
        %721 = vmatpush1.msra.mxu0 0.0
        %722 = vmatprep.mubr.f32.mxu0 0.0
        %723 = vmatmul.mubr.f32.gmra.mrb[0].mxu0 %v523
        %v724 = vpop.f32.mrb[0].mxu0
        %v725 = vadd.f32 %v650, %v724
        %v726 = vpop.f32.mrb[0].mxu0
        %727 = vmatprep.mubr.f32.mxu0 0.0
        %728 = vmatmul.mubr.f32.gmra.mrb[0].mxu0 %v525
        %v729 = vpop.f32.mrb[0].mxu0
        %v730 = vadd.f32 %v655, %v729
        %v731 = vpop.f32.mrb[0].mxu0
        %732 = vdwg.mxu0
        %v733 = vadd.f32 %v725, %v271
        %v734 = vadd.f32 %v730, %v273
        %v735 = vmax.f32 %v733, 0.0
        %v736 = vmax.f32 %v734, 0.0
        %737 = vst [vmem:[%s247] sm:$0xff] %v735
        %738 = vst [vmem:[%s247 + $0x8] sm:$0xff] %v736
        %s739 = sand.u32 %s139, 1
        %s740 = scalar_lea.sflag [#allocation4], %s739
        %s741 = sand.u32 %s139, 1
        %s742 = smul.addr %s741, 16
        %s743 = scalar_lea.vmem [#allocation7], %s742
        // Predicated region
        $region49: #{tpu_custom_call.1} parent=39 // pred_check
          %p744 = pneg %p149
        $region50: #{tpu_custom_call.1} parent=39 // pred_check_branch
          %746 = sbr.rel (%p744) target = $region52
        $region51: #{tpu_custom_call.1} parent=39 // pred_region
          %s748 = ssub.s32 256, 256
          %749 = vsyncadd %s740, %s748
          %s750 = smul.addr %s21, 2
          %s751 = smul.addr %s750, 128
          %s752 = scalar_lea.hbm %s5, %s751
          %s753 = sshll.u32 %s743, 4
          %s754 = int_to_ptr.vmem [resolvable:$true] %s753
          %759 = dma.vmem_to_hbm [thread:$0]  %s754, 256, %s752, %s740, 128, 128, 8
        $region52: #{tpu_custom_call.1} parent=39 // pred_fallthru
          _
      $region40: #{tpu_custom_call.1} parent=5 // pred_fallthru
        _
      %p760 = scmp.le.s32.totalorder 2, %s16
      // Predicated region
      $region53: #{tpu_custom_call.1} parent=5 // pred_check
        %p761 = pneg %p760
      $region54: #{tpu_custom_call.1} parent=5 // pred_check_branch
        %763 = sbr.rel (%p761) target = $region56
      $region55: #{tpu_custom_call.1} parent=5 // pred_region
        %s764 = ssub.s32 %s16, 2
        // Predicated region
        $region57: #{tpu_custom_call.1} parent=55 // pred_check
          %p765 = pneg %p155
        $region58: #{tpu_custom_call.1} parent=55 // pred_check_branch
          %767 = sbr.rel (%p765) target = $region60
        $region59: #{tpu_custom_call.1} parent=55 // pred_region
          %s768 = sand.u32 %s140, 1
          %s769 = scalar_lea.sflag [#allocation4], %s768
          %s770 = sand.u32 %s140, 1
          %s771 = smul.addr %s770, 16
          %s772 = scalar_lea.vmem [#allocation7], %s771
          %773 = dma.done %s769, 256
        $region60: #{tpu_custom_call.1} parent=55 // pred_fallthru
          _
      $region56: #{tpu_custom_call.1} parent=5 // pred_fallthru
        _
    $region6: #{tpu_custom_call.1} parent=1 // loop_footer
      %s20 = sadd.s32 1, %s16
    $region7: #{tpu_custom_call.1} parent=1 // loop_footer_branch
      %15 = sbr.rel target = $region3
    $region8: #{tpu_custom_call.1} parent=1 // loop_exit
      _
    %774 = vsyncpa [#allocation3], 1
    %s775 = scalar_lea.sflag [#allocation3], 1
    %776 = vsyncpa %s775, 1
    %777 = vsyncpa [#allocation6], 1
    %778 = vsyncpa [#allocation4], 1
    %s779 = scalar_lea.sflag [#allocation4], 1
    %780 = vsyncpa %s779, 1

// kernel: tpu_custom_call.1
$region0: #{tpu_custom_call.1}
  #allocation0 [shape = 'u32[]', space=smem, size = 0x4, offset = 0x4, fixed_abs, tag = 'smem constant byte address 0x4 - core index']
  #allocation1 [shape = 'u32[144,128]{1,0:T(1,128)}', space=vmem, size = 0x12000, scoped, tag = 'internal scratch']
  %s0 = inlined_call_operand.vmem [shape: f32[2,20,128], index: 0, kind: input, shape index: {}]
  %s1 = inlined_call_operand.hbm [shape: f32[384,128], index: 1, kind: input, shape index: {}]
  %s2 = inlined_call_operand.vmem [shape: f32[1,128], index: 2, kind: input, shape index: {}]
  %s3 = inlined_call_operand.hbm [shape: f32[384,128], index: 3, kind: input, shape index: {}]
  %s4 = inlined_call_operand.vmem [shape: f32[1,128], index: 4, kind: input, shape index: {}]
  %s5 = inlined_call_operand.hbm [shape: f32[2,16,128], index: 5, kind: output, shape index: {}]
  %s6 = sld [smem:[#allocation0]]
  $region61: #{tpu_custom_call.1} parent=0
    _
  %s8 = ssub.s32 1, %s6
  %s9 = scalar_select 0, %s8, %s6
  $region1: #{tpu_custom_call.1} parent=0
    #allocation2 [shape = 'u8[196608]{0}', space=vmem, size = 0x30000, scoped, tag = 'input window, operand 1, single buffered']
    #allocation3 [shape = 's32[2]{0}', space=sflag, size = 0x8, scoped, tag = 'scoped memory for tpu_custom_call.1']
    #allocation4 [shape = 's32[2]{0}', space=sflag, size = 0x8, scoped, tag = 'scoped memory for tpu_custom_call.1']
    #allocation5 [shape = 'u8[196608]{0}', space=vmem, size = 0x30000, scoped, tag = 'input window, operand 3, single buffered']
    #allocation6 [shape = 's32[1]{0}', space=sflag, size = 0x4, scoped, tag = 'scoped memory for tpu_custom_call.1']
    #allocation7 [shape = 'u8[16384]{0}', space=vmem, size = 0x4000, scoped, tag = 'output window, operand 0']
    %10 = vsyncpa [#allocation3], 0
    %11 = vsyncpa [#allocation6], 0
    %12 = vsyncpa [#allocation4], 0
    %s13 = scalar_lea.sflag [#allocation4], 1
    %14 = vsyncpa %s13, 0
    loop: start=0, step=1, limit=4
    $region2: #{tpu_custom_call.1} parent=1 // loop_pre_header
      _
    $region3: #{tpu_custom_call.1} parent=1 // loop_header
      %s16 = sphi 0, %s20
      %p17 = scmp.ge.s32.totalorder %s16, 4
      %s26 = sphi 0, %s28
      %s29 = sphi 0, %s26
      %s30 = sphi 0, %s29
      %s46 = sphi 0, %s30
      %s50 = sphi 0, %s50
      %s52 = sphi 0, %s50
      %s53 = sphi 0, %s52
      %s67 = sphi 0, %s53
      %s71 = sphi 0, %s71
      %s73 = sphi 0, %s71
      %s74 = sphi 0, %s73
      %s88 = sphi 0, %s74
      %s92 = sphi 0, %s92
      %s94 = sphi 0, %s92
      %s95 = sphi 0, %s94
      %s109 = sphi 0, %s95
      %s113 = sphi 0, %s113
      %s115 = sphi 0, %s113
      %s116 = sphi 0, %s115
      %s130 = sphi 0, %s116
      %s136 = sphi 0, %s138
      %s139 = sphi 0, %s136
      %s140 = sphi 0, %s139
      %s156 = sphi 0, %s140
    $region4: #{tpu_custom_call.1} parent=1 // loop_header_branch
      %19 = sbr.rel (%p17) target = $region8
    $region5: #{tpu_custom_call.1} parent=1 // loop_body
      %s21 = ssub.s32 %s16, 1
      %s22 = ssub.s32 %s16, 2
      %s23 = sadd.s32 %s16, 1
      %s24 = ssub.s32 %s16, %s23
      %p25 = scmp.eq.s32.totalorder %s24, 0
      %s27 = sadd.s32 %s26, 1
      %s28 = scalar_select %p25, %s26, %s27
      %p31 = pneg %p25
      %p32 = scmp.eq.s32.totalorder %s16, 1
      %p33 = por %p31, %p32
      %p34 = scmp.ne.s32.totalorder %s26, %s29
      %p35 = scmp.eq.s32.totalorder %s16, 0
      %p36 = por %p34, %p35
      %p37 = scmp.ne.s32.totalorder %s26, %s29
      %p38 = scmp.eq.s32.totalorder %s21, 1
      %p39 = por %p37, %p38
      %p40 = scmp.ne.s32.totalorder %s29, %s30
      %p41 = scmp.eq.s32.totalorder %s21, 0
      %p42 = por %p40, %p41
      %p43 = scmp.ne.s32.totalorder %s29, %s30
      %p44 = scmp.eq.s32.totalorder %s22, 1
      %p45 = por %p43, %p44
      %p47 = scmp.ne.s32.totalorder %s30, %s46
      %p48 = scmp.eq.s32.totalorder %s22, 0
      %p49 = por %p47, %p48
      %s51 = sadd.s32 %s50, 1
      %p54 = scmp.eq.s32.totalorder %s16, 1
      %p55 = scmp.ne.s32.totalorder %s50, %s52
      %p56 = scmp.eq.s32.totalorder %s16, 0
      %p57 = por %p55, %p56
      %p58 = scmp.ne.s32.totalorder %s50, %s52
      %p59 = scmp.eq.s32.totalorder %s21, 1
      %p60 = por %p58, %p59
      %p61 = scmp.ne.s32.totalorder %s52, %s53
      %p62 = scmp.eq.s32.totalorder %s21, 0
      %p63 = por %p61, %p62
      %p64 = scmp.ne.s32.totalorder %s52, %s53
      %p65 = scmp.eq.s32.totalorder %s22, 1
      %p66 = por %p64, %p65
      %p68 = scmp.ne.s32.totalorder %s53, %s67
      %p69 = scmp.eq.s32.totalorder %s22, 0
      %p70 = por %p68, %p69
      %s72 = sadd.s32 %s71, 1
      %p75 = scmp.eq.s32.totalorder %s16, 1
      %p76 = scmp.ne.s32.totalorder %s71, %s73
      %p77 = scmp.eq.s32.totalorder %s16, 0
      %p78 = por %p76, %p77
      %p79 = scmp.ne.s32.totalorder %s71, %s73
      %p80 = scmp.eq.s32.totalorder %s21, 1
      %p81 = por %p79, %p80
      %p82 = scmp.ne.s32.totalorder %s73, %s74
      %p83 = scmp.eq.s32.totalorder %s21, 0
      %p84 = por %p82, %p83
      %p85 = scmp.ne.s32.totalorder %s73, %s74
      %p86 = scmp.eq.s32.totalorder %s22, 1
      %p87 = por %p85, %p86
      %p89 = scmp.ne.s32.totalorder %s74, %s88
      %p90 = scmp.eq.s32.totalorder %s22, 0
      %p91 = por %p89, %p90
      %s93 = sadd.s32 %s92, 1
      %p96 = scmp.eq.s32.totalorder %s16, 1
      %p97 = scmp.ne.s32.totalorder %s92, %s94
      %p98 = scmp.eq.s32.totalorder %s16, 0
      %p99 = por %p97, %p98
      %p100 = scmp.ne.s32.totalorder %s92, %s94
      %p101 = scmp.eq.s32.totalorder %s21, 1
      %p102 = por %p100, %p101
      %p103 = scmp.ne.s32.totalorder %s94, %s95
      %p104 = scmp.eq.s32.totalorder %s21, 0
      %p105 = por %p103, %p104
      %p106 = scmp.ne.s32.totalorder %s94, %s95
      %p107 = scmp.eq.s32.totalorder %s22, 1
      %p108 = por %p106, %p107
      %p110 = scmp.ne.s32.totalorder %s95, %s109
      %p111 = scmp.eq.s32.totalorder %s22, 0
      %p112 = por %p110, %p111
      %s114 = sadd.s32 %s113, 1
      %p117 = scmp.eq.s32.totalorder %s16, 1
      %p118 = scmp.ne.s32.totalorder %s113, %s115
      %p119 = scmp.eq.s32.totalorder %s16, 0
      %p120 = por %p118, %p119
      %p121 = scmp.ne.s32.totalorder %s113, %s115
      %p122 = scmp.eq.s32.totalorder %s21, 1
      %p123 = por %p121, %p122
      %p124 = scmp.ne.s32.totalorder %s115, %s116
      %p125 = scmp.eq.s32.totalorder %s21, 0
      %p126 = por %p124, %p125
      %p127 = scmp.ne.s32.totalorder %s115, %s116
      %p128 = scmp.eq.s32.totalorder %s22, 1
      %p129 = por %p127, %p128
      %p131 = scmp.ne.s32.totalorder %s116, %s130
      %p132 = scmp.eq.s32.totalorder %s22, 0
      %p133 = por %p131, %p132
      %s134 = ssub.s32 %s16, %s23
      %p135 = scmp.eq.s32.totalorder %s134, 0
      %s137 = sadd.s32 %s136, 1
      %s138 = scalar_select %p135, %s136, %s137
      %p141 = pneg %p135
      %p142 = scmp.eq.s32.totalorder %s16, 1
      %p143 = por %p141, %p142
      %p144 = scmp.ne.s32.totalorder %s136, %s139
      %p145 = scmp.eq.s32.totalorder %s16, 0
      %p146 = por %p144, %p145
      %p147 = scmp.ne.s32.totalorder %s136, %s139
      %p148 = scmp.eq.s32.totalorder %s21, 1
      %p149 = por %p147, %p148
      %p150 = scmp.ne.s32.totalorder %s139, %s140
      %p151 = scmp.eq.s32.totalorder %s21, 0
      %p152 = por %p150, %p151
      %p153 = scmp.ne.s32.totalorder %s139, %s140
      %p154 = scmp.eq.s32.totalorder %s22, 1
      %p155 = por %p153, %p154
      %p157 = scmp.ne.s32.totalorder %s140, %s156
      %p158 = scmp.eq.s32.totalorder %s22, 0
      %p159 = por %p157, %p158
      %p160 = scmp.le.s32.totalorder 1, %s16
      %p161 = scmp.lt.s32.totalorder %s16, 3
      %p162 = pnand %p160, %p161
      %p163 = pneg %p162
      // Predicated region
      $region9: #{tpu_custom_call.1} parent=5 // pred_check
        _
      $region10: #{tpu_custom_call.1} parent=5 // pred_check_branch
        %165 = sbr.rel (%p162) target = $region12
      $region11: #{tpu_custom_call.1} parent=5 // pred_region
        %s166 = ssub.s32 %s16, 1
        // Predicated region
        $region13: #{tpu_custom_call.1} parent=11 // pred_check
          %p167 = pneg %p63
        $region14: #{tpu_custom_call.1} parent=11 // pred_check_branch
          %169 = sbr.rel (%p167) target = $region16
        $region15: #{tpu_custom_call.1} parent=11 // pred_region
          %s171 = ssub.s32 6144, 6144
          %172 = vsyncadd [#allocation3], %s171
          %s173 = sshll.u32 [#allocation2], 4
          %s174 = int_to_ptr.vmem [resolvable:$true] %s173
          %179 = dma.hbm_to_vmem [thread:$0]  %s1, 6144, %s174, [#allocation3], 128, 128, 8
        $region16: #{tpu_custom_call.1} parent=11 // pred_fallthru
          _
        // Predicated region
        $region17: #{tpu_custom_call.1} parent=11 // pred_check
          %p180 = pneg %p84
        $region18: #{tpu_custom_call.1} parent=11 // pred_check_branch
          %182 = sbr.rel (%p180) target = $region20
        $region19: #{tpu_custom_call.1} parent=11 // pred_region
          _
        $region20: #{tpu_custom_call.1} parent=11 // pred_fallthru
          _
        // Predicated region
        $region21: #{tpu_custom_call.1} parent=11 // pred_check
          %p183 = pneg %p105
        $region22: #{tpu_custom_call.1} parent=11 // pred_check_branch
          %185 = sbr.rel (%p183) target = $region24
        $region23: #{tpu_custom_call.1} parent=11 // pred_region
          %s187 = ssub.s32 6144, 6144
          %188 = vsyncadd [#allocation6], %s187
          %s189 = sshll.u32 [#allocation5], 4
          %s190 = int_to_ptr.vmem [resolvable:$true] %s189
          %195 = dma.hbm_to_vmem [thread:$0]  %s3, 6144, %s190, [#allocation6], 128, 128, 8
        $region24: #{tpu_custom_call.1} parent=11 // pred_fallthru
          _
        // Predicated region
        $region25: #{tpu_custom_call.1} parent=11 // pred_check
          %p196 = pneg %p126
        $region26: #{tpu_custom_call.1} parent=11 // pred_check_branch
          %198 = sbr.rel (%p196) target = $region28
        $region27: #{tpu_custom_call.1} parent=11 // pred_region
          _
        $region28: #{tpu_custom_call.1} parent=11 // pred_fallthru
          _
      $region12: #{tpu_custom_call.1} parent=5 // pred_fallthru
        _
      %p199 = scmp.lt.s32.totalorder %s16, 2
      // Predicated region
      $region29: #{tpu_custom_call.1} parent=5 // pred_check
        %p200 = pneg %p199
      $region30: #{tpu_custom_call.1} parent=5 // pred_check_branch
        %202 = sbr.rel (%p200) target = $region32
      $region31: #{tpu_custom_call.1} parent=5 // pred_region
        // Predicated region
        $region33: #{tpu_custom_call.1} parent=31 // pred_check
          %p203 = pneg %p36
        $region34: #{tpu_custom_call.1} parent=31 // pred_check_branch
          %205 = sbr.rel (%p203) target = $region36
        $region35: #{tpu_custom_call.1} parent=31 // pred_region
          %p206 = scmp.lt.s32.totalorder %s16, 1
          %s207 = scalar_select %p206, %s16, 1
          %s208 = smul.addr %s207, 3
          %s209 = smul.addr %s208, 8
          %s210 = scalar_lea.vmem %s0, %s209
        $region36: #{tpu_custom_call.1} parent=31 // pred_fallthru
          _
      $region32: #{tpu_custom_call.1} parent=5 // pred_fallthru
        _
      %p211 = scmp.le.s32.totalorder 1, %s16
      %p212 = scmp.lt.s32.totalorder %s16, 3
      %p213 = pnand %p211, %p212
      %p214 = pneg %p213
      // Predicated region
      $region37: #{tpu_custom_call.1} parent=5 // pred_check
        _
      $region38: #{tpu_custom_call.1} parent=5 // pred_check_branch
        %216 = sbr.rel (%p213) target = $region40
      $region39: #{tpu_custom_call.1} parent=5 // pred_region
        %s217 = ssub.s32 %s16, 1
        // Predicated region
        $region41: #{tpu_custom_call.1} parent=39 // pred_check
          %p218 = pneg %p63
        $region42: #{tpu_custom_call.1} parent=39 // pred_check_branch
          %220 = sbr.rel (%p218) target = $region44
        $region43: #{tpu_custom_call.1} parent=39 // pred_region
          %221 = dma.done [#allocation3], 6144
        $region44: #{tpu_custom_call.1} parent=39 // pred_fallthru
          _
        // Predicated region
        $region45: #{tpu_custom_call.1} parent=39 // pred_check
          %p222 = pneg %p105
        $region46: #{tpu_custom_call.1} parent=39 // pred_check_branch
          %224 = sbr.rel (%p222) target = $region48
        $region47: #{tpu_custom_call.1} parent=39 // pred_region
          %225 = dma.done [#allocation6], 6144
        $region48: #{tpu_custom_call.1} parent=39 // pred_fallthru
          _
        %p226 = scmp.lt.s32.totalorder %s21, 1
        %s227 = scalar_select %p226, %s21, 1
        %s228 = smul.addr %s227, 3
        %s229 = smul.addr %s228, 8
        %s230 = scalar_lea.vmem %s0, %s229
        %p231 = pneg %p42
        %p232 = pneg %p39
        %p233 = pneg %p63
        %p234 = pneg %p60
        %p235 = pneg %p84
        %p236 = pneg %p81
        %p237 = pneg %p105
        %p238 = pneg %p102
        %p239 = pneg %p126
        %p240 = pneg %p123
        %p241 = pneg %p152
        %p242 = pneg %p149
        %s243 = sand.u32 %s139, 1
        %s244 = scalar_lea.sflag [#allocation4], %s243
        %s245 = sand.u32 %s139, 1
        %s246 = smul.addr %s245, 16
        %s247 = scalar_lea.vmem [#allocation7], %s246
        %p248 = scmp.lt.s32.totalorder %s21, 1
        %s249 = scalar_select %p248, %s21, 1
        %s250 = smul.addr %s249, 3
        %s251 = smul.addr %s250, 8
        %s252 = scalar_lea.vmem %s0, %s251
        %v253 = vld [vmem:[%s252] sm:$0xff]
        %v254 = vld [vmem:[%s252 + $0x8] sm:$0xff]
        %v255 = vld [vmem:[%s252 + $0x10] sm:$0xf]
        %vm259 = vcmask 1046528
        %v260 = vrot.slane %v253, 1
        %v261 = vrot.slane %v254, 1
        %v262 = vsel %vm259, %v260, %v261
        %v263 = vrot.slane %v255, 1
        %v264 = vsel %vm259, %v261, %v263
        %vm268 = vcmask 1045504
        %v269 = vrot.slane %v253, 2
        %v270 = vrot.slane %v254, 2
        %v271 = vsel %vm268, %v269, %v270
        %v272 = vrot.slane %v255, 2
        %v273 = vsel %vm268, %v270, %v272
        %v277 = vld [vmem:[#allocation2] sm:$0xff]
        %v278 = vld [vmem:[#allocation2 + $0x8] sm:$0xff]
        %v279 = vld [vmem:[#allocation2 + $0x10] sm:$0xff]
        %v280 = vld [vmem:[#allocation2 + $0x18] sm:$0xff]
        %v281 = vld [vmem:[#allocation2 + $0x20] sm:$0xff]
        %v282 = vld [vmem:[#allocation2 + $0x28] sm:$0xff]
        %v283 = vld [vmem:[#allocation2 + $0x30] sm:$0xff]
        %v284 = vld [vmem:[#allocation2 + $0x38] sm:$0xff]
        %v285 = vld [vmem:[#allocation2 + $0x40] sm:$0xff]
        %v286 = vld [vmem:[#allocation2 + $0x48] sm:$0xff]
        %v287 = vld [vmem:[#allocation2 + $0x50] sm:$0xff]
        %v288 = vld [vmem:[#allocation2 + $0x58] sm:$0xff]
        %v289 = vld [vmem:[#allocation2 + $0x60] sm:$0xff]
        %v290 = vld [vmem:[#allocation2 + $0x68] sm:$0xff]
        %v291 = vld [vmem:[#allocation2 + $0x70] sm:$0xff]
        %v292 = vld [vmem:[#allocation2 + $0x78] sm:$0xff]
        %v293 = vld [vmem:[#allocation2 + $0x80] sm:$0xff]
        %v294 = vld [vmem:[#allocation2 + $0x88] sm:$0xff]
        %v295 = vld [vmem:[#allocation2 + $0x90] sm:$0xff]
        %v296 = vld [vmem:[#allocation2 + $0x98] sm:$0xff]
        %v297 = vld [vmem:[#allocation2 + $0xa0] sm:$0xff]
        %v298 = vld [vmem:[#allocation2 + $0xa8] sm:$0xff]
        %v299 = vld [vmem:[#allocation2 + $0xb0] sm:$0xff]
        %v300 = vld [vmem:[#allocation2 + $0xb8] sm:$0xff]
        %v301 = vld [vmem:[#allocation2 + $0xc0] sm:$0xff]
        %v302 = vld [vmem:[#allocation2 + $0xc8] sm:$0xff]
        %v303 = vld [vmem:[#allocation2 + $0xd0] sm:$0xff]
        %v304 = vld [vmem:[#allocation2 + $0xd8] sm:$0xff]
        %v305 = vld [vmem:[#allocation2 + $0xe0] sm:$0xff]
        %v306 = vld [vmem:[#allocation2 + $0xe8] sm:$0xff]
        %v307 = vld [vmem:[#allocation2 + $0xf0] sm:$0xff]
        %v308 = vld [vmem:[#allocation2 + $0xf8] sm:$0xff]
        %v309 = vld [vmem:[#allocation2 + $0x100] sm:$0xff]
        %v310 = vld [vmem:[#allocation2 + $0x108] sm:$0xff]
        %v311 = vld [vmem:[#allocation2 + $0x110] sm:$0xff]
        %v312 = vld [vmem:[#allocation2 + $0x118] sm:$0xff]
        %v313 = vld [vmem:[#allocation2 + $0x120] sm:$0xff]
        %v314 = vld [vmem:[#allocation2 + $0x128] sm:$0xff]
        %v315 = vld [vmem:[#allocation2 + $0x130] sm:$0xff]
        %v316 = vld [vmem:[#allocation2 + $0x138] sm:$0xff]
        %v317 = vld [vmem:[#allocation2 + $0x140] sm:$0xff]
        %v318 = vld [vmem:[#allocation2 + $0x148] sm:$0xff]
        %v319 = vld [vmem:[#allocation2 + $0x150] sm:$0xff]
        %v320 = vld [vmem:[#allocation2 + $0x158] sm:$0xff]
        %v321 = vld [vmem:[#allocation2 + $0x160] sm:$0xff]
        %v322 = vld [vmem:[#allocation2 + $0x168] sm:$0xff]
        %v323 = vld [vmem:[#allocation2 + $0x170] sm:$0xff]
        %v324 = vld [vmem:[#allocation2 + $0x178] sm:$0xff]
        %v325 = vld [vmem:[%s2] sm:$0x1]
        %v327 = vlaneseq
        %v328 = vshrl.u32 %v327, 7
        %v329 = vsub.s32 0, %v328
        %v330 = vrot.slane %v325, %v329
        %332 = vmatprep.subr.mxu0 0.0
        %333 = vmatpush1.msra.mxu0 %v277
        %334 = vmatprep.subr.mxu0 0.0
        %335 = vmatpush1.msra.mxu0 %v278
        %336 = vmatprep.subr.mxu0 0.0
        %337 = vmatpush1.msra.mxu0 %v279
        %338 = vmatprep.subr.mxu0 0.0
        %339 = vmatpush1.msra.mxu0 %v280
        %340 = vmatprep.subr.mxu0 0.0
        %341 = vmatpush1.msra.mxu0 %v281
        %342 = vmatprep.subr.mxu0 0.0
        %343 = vmatpush1.msra.mxu0 %v282
        %344 = vmatprep.subr.mxu0 0.0
        %345 = vmatpush1.msra.mxu0 %v283
        %346 = vmatprep.subr.mxu0 0.0
        %347 = vmatpush1.msra.mxu0 %v284
        %348 = vmatprep.subr.mxu0 0.0
        %349 = vmatpush1.msra.mxu0 %v285
        %350 = vmatprep.subr.mxu0 0.0
        %351 = vmatpush1.msra.mxu0 %v286
        %352 = vmatprep.subr.mxu0 0.0
        %353 = vmatpush1.msra.mxu0 %v287
        %354 = vmatprep.subr.mxu0 0.0
        %355 = vmatpush1.msra.mxu0 %v288
        %356 = vmatprep.subr.mxu0 0.0
        %357 = vmatpush1.msra.mxu0 %v289
        %358 = vmatprep.subr.mxu0 0.0
        %359 = vmatpush1.msra.mxu0 %v290
        %360 = vmatprep.subr.mxu0 0.0
        %361 = vmatpush1.msra.mxu0 %v291
        %362 = vmatprep.subr.mxu0 0.0
        %363 = vmatpush1.msra.mxu0 %v292
        %364 = vmatprep.subr.mxu0 0.0
        %365 = vmatpush1.msra.mxu0 %v293
        %366 = vmatprep.subr.mxu0 0.0
        %367 = vmatpush1.msra.mxu0 %v294
        %368 = vmatprep.subr.mxu0 0.0
        %369 = vmatpush1.msra.mxu0 %v295
        %370 = vmatprep.subr.mxu0 0.0
        %371 = vmatpush1.msra.mxu0 %v296
        %372 = vmatprep.subr.mxu0 0.0
        %373 = vmatpush1.msra.mxu0 %v297
        %374 = vmatprep.subr.mxu0 0.0
        %375 = vmatpush1.msra.mxu0 %v298
        %376 = vmatprep.subr.mxu0 0.0
        %377 = vmatpush1.msra.mxu0 %v299
        %378 = vmatprep.subr.mxu0 0.0
        %379 = vmatpush1.msra.mxu0 %v300
        %380 = vmatprep.subr.mxu0 0.0
        %381 = vmatpush1.msra.mxu0 %v301
        %382 = vmatprep.subr.mxu0 0.0
        %383 = vmatpush1.msra.mxu0 %v302
        %384 = vmatprep.subr.mxu0 0.0
        %385 = vmatpush1.msra.mxu0 %v303
        %386 = vmatprep.subr.mxu0 0.0
        %387 = vmatpush1.msra.mxu0 %v304
        %388 = vmatprep.subr.mxu0 0.0
        %389 = vmatpush1.msra.mxu0 %v305
        %390 = vmatprep.subr.mxu0 0.0
        %391 = vmatpush1.msra.mxu0 %v306
        %392 = vmatprep.subr.mxu0 0.0
        %393 = vmatpush1.msra.mxu0 %v307
        %394 = vmatprep.subr.mxu0 0.0
        %395 = vmatpush1.msra.mxu0 %v308
        %396 = vmatprep.mubr.f32.mxu0 %v262
        %397 = vmatmul.mubr.f32.gmra.mrb[0].mxu0 %v253
        %v398 = vpop.f32.mrb[0].mxu0
        %v399 = vadd.f32 %v330, %v398
        %v400 = vpop.f32.mrb[0].mxu0
        %401 = vmatprep.mubr.f32.mxu0 %v264
        %402 = vmatmul.mubr.f32.gmra.mrb[0].mxu0 %v254
        %v403 = vpop.f32.mrb[0].mxu0
        %v404 = vadd.f32 %v330, %v403
        %v405 = vpop.f32.mrb[0].mxu0
        %406 = vmatprep.mubr.f32.mxu0 %v263
        %407 = vmatmul.mubr.f32.gmra.mrb[0].mxu0 %v255
        %v408 = vpop.f32.mrb[0].mxu0
        %v409 = vadd.f32 %v330, %v408
        %v410 = vpop.f32.mrb[0].mxu0
        %411 = vdwg.mxu0
        %412 = vmatprep.subr.mxu0 0.0
        %413 = vmatpush1.msra.mxu0 %v309
        %414 = vmatprep.subr.mxu0 0.0
        %415 = vmatpush1.msra.mxu0 %v310
        %416 = vmatprep.subr.mxu0 0.0
        %417 = vmatpush1.msra.mxu0 %v311
        %418 = vmatprep.subr.mxu0 0.0
        %419 = vmatpush1.msra.mxu0 %v312
        %420 = vmatprep.subr.mxu0 0.0
        %421 = vmatpush1.msra.mxu0 %v313
        %422 = vmatprep.subr.mxu0 0.0
        %423 = vmatpush1.msra.mxu0 %v314
        %424 = vmatprep.subr.mxu0 0.0
        %425 = vmatpush1.msra.mxu0 %v315
        %426 = vmatprep.subr.mxu0 0.0
        %427 = vmatpush1.msra.mxu0 %v316
        %428 = vmatprep.subr.mxu0 0.0
        %429 = vmatpush1.msra.mxu0 %v317
        %430 = vmatprep.subr.mxu0 0.0
        %431 = vmatpush1.msra.mxu0 %v318
        %432 = vmatprep.subr.mxu0 0.0
        %433 = vmatpush1.msra.mxu0 %v319
        %434 = vmatprep.subr.mxu0 0.0
        %435 = vmatpush1.msra.mxu0 %v320
        %436 = vmatprep.subr.mxu0 0.0
        %437 = vmatpush1.msra.mxu0 %v321
        %438 = vmatprep.subr.mxu0 0.0
        %439 = vmatpush1.msra.mxu0 %v322
        %440 = vmatprep.subr.mxu0 0.0
        %441 = vmatpush1.msra.mxu0 %v323
        %442 = vmatprep.subr.mxu0 0.0
        %443 = vmatpush1.msra.mxu0 %v324
        %444 = vmatprep.subr.mxu0 0.0
        %445 = vmatpush1.msra.mxu0 0.0
        %446 = vmatprep.subr.mxu0 0.0
        %447 = vmatpush1.msra.mxu0 0.0
        %448 = vmatprep.subr.mxu0 0.0
        %449 = vmatpush1.msra.mxu0 0.0
        %450 = vmatprep.subr.mxu0 0.0
        %451 = vmatpush1.msra.mxu0 0.0
        %452 = vmatprep.subr.mxu0 0.0
        %453 = vmatpush1.msra.mxu0 0.0
        %454 = vmatprep.subr.mxu0 0.0
        %455 = vmatpush1.msra.mxu0 0.0
        %456 = vmatprep.subr.mxu0 0.0
        %457 = vmatpush1.msra.mxu0 0.0
        %458 = vmatprep.subr.mxu0 0.0
        %459 = vmatpush1.msra.mxu0 0.0
        %460 = vmatprep.subr.mxu0 0.0
        %461 = vmatpush1.msra.mxu0 0.0
        %462 = vmatprep.subr.mxu0 0.0
        %463 = vmatpush1.msra.mxu0 0.0
        %464 = vmatprep.subr.mxu0 0.0
        %465 = vmatpush1.msra.mxu0 0.0
        %466 = vmatprep.subr.mxu0 0.0
        %467 = vmatpush1.msra.mxu0 0.0
        %468 = vmatprep.subr.mxu0 0.0
        %469 = vmatpush1.msra.mxu0 0.0
        %470 = vmatprep.subr.mxu0 0.0
        %471 = vmatpush1.msra.mxu0 0.0
        %472 = vmatprep.subr.mxu0 0.0
        %473 = vmatpush1.msra.mxu0 0.0
        %474 = vmatprep.subr.mxu0 0.0
        %475 = vmatpush1.msra.mxu0 0.0
        %476 = vmatprep.mubr.f32.mxu0 0.0
        %477 = vmatmul.mubr.f32.gmra.mrb[0].mxu0 %v271
        %v478 = vpop.f32.mrb[0].mxu0
        %v479 = vadd.f32 %v399, %v478
        %v480 = vpop.f32.mrb[0].mxu0
        %481 = vmatprep.mubr.f32.mxu0 0.0
        %482 = vmatmul.mubr.f32.gmra.mrb[0].mxu0 %v273
        %v483 = vpop.f32.mrb[0].mxu0
        %v484 = vadd.f32 %v404, %v483
        %v485 = vpop.f32.mrb[0].mxu0
        %486 = vmatprep.mubr.f32.mxu0 0.0
        %487 = vmatmul.mubr.f32.gmra.mrb[0].mxu0 %v272
        %v488 = vpop.f32.mrb[0].mxu0
        %v489 = vadd.f32 %v409, %v488
        %v490 = vpop.f32.mrb[0].mxu0
        %491 = vdwg.mxu0
        %v492 = vmax.f32 %v479, 0.0
        %v493 = vmax.f32 %v484, 0.0
        %v494 = vmax.f32 %v489, 0.0
        %v495 = vlaneseq
        %v496 = vshrl.u32 %v495, 7
        %v497 = vadd.s32 %v496, 8
        %v498 = vadd.s32 %v496, 16
        %vm499 = vcmp.ge.s32.totalorder %v496, 1
        %vm500 = vcmp.ge.s32.totalorder %v497, 1
        %vm501 = vcmp.ge.s32.totalorder %v498, 1
        %vm502 = vcmp.lt.s32.totalorder %v496, 17
        %vm503 = vcmp.lt.s32.totalorder %v497, 17
        %vm504 = vcmp.lt.s32.totalorder %v498, 17
        %vm505 = vmand %vm499, %vm502
        %vm506 = vmand %vm500, %vm503
        %vm507 = vmand %vm501, %vm504
        %v508 = vsel %vm505, %v492, 0.0
        %v509 = vsel %vm506, %v493, 0.0
        %v510 = vsel %vm507, %v494, 0.0
        %v514 = vrot.slane %v508, 1
        %v515 = vrot.slane %v509, 1
        %v516 = vsel %vm259, %v514, %v515
        %v517 = vrot.slane %v510, 1
        %v518 = vsel %vm259, %v515, %v517
        %v521 = vrot.slane %v508, 2
        %v522 = vrot.slane %v509, 2
        %v523 = vsel %vm268, %v521, %v522
        %v524 = vrot.slane %v510, 2
        %v525 = vsel %vm268, %v522, %v524
        %v528 = vld [vmem:[#allocation5] sm:$0xff]
        %v529 = vld [vmem:[#allocation5 + $0x8] sm:$0xff]
        %v530 = vld [vmem:[#allocation5 + $0x10] sm:$0xff]
        %v531 = vld [vmem:[#allocation5 + $0x18] sm:$0xff]
        %v532 = vld [vmem:[#allocation5 + $0x20] sm:$0xff]
        %v533 = vld [vmem:[#allocation5 + $0x28] sm:$0xff]
        %v534 = vld [vmem:[#allocation5 + $0x30] sm:$0xff]
        %v535 = vld [vmem:[#allocation5 + $0x38] sm:$0xff]
        %v536 = vld [vmem:[#allocation5 + $0x40] sm:$0xff]
        %v537 = vld [vmem:[#allocation5 + $0x48] sm:$0xff]
        %v538 = vld [vmem:[#allocation5 + $0x50] sm:$0xff]
        %v539 = vld [vmem:[#allocation5 + $0x58] sm:$0xff]
        %v540 = vld [vmem:[#allocation5 + $0x60] sm:$0xff]
        %v541 = vld [vmem:[#allocation5 + $0x68] sm:$0xff]
        %v542 = vld [vmem:[#allocation5 + $0x70] sm:$0xff]
        %v543 = vld [vmem:[#allocation5 + $0x78] sm:$0xff]
        %v544 = vld [vmem:[#allocation5 + $0x80] sm:$0xff]
        %v545 = vld [vmem:[#allocation5 + $0x88] sm:$0xff]
        %v546 = vld [vmem:[#allocation5 + $0x90] sm:$0xff]
        %v547 = vld [vmem:[#allocation5 + $0x98] sm:$0xff]
        %v548 = vld [vmem:[#allocation5 + $0xa0] sm:$0xff]
        %v549 = vld [vmem:[#allocation5 + $0xa8] sm:$0xff]
        %v550 = vld [vmem:[#allocation5 + $0xb0] sm:$0xff]
        %v551 = vld [vmem:[#allocation5 + $0xb8] sm:$0xff]
        %v552 = vld [vmem:[#allocation5 + $0xc0] sm:$0xff]
        %v553 = vld [vmem:[#allocation5 + $0xc8] sm:$0xff]
        %v554 = vld [vmem:[#allocation5 + $0xd0] sm:$0xff]
        %v555 = vld [vmem:[#allocation5 + $0xd8] sm:$0xff]
        %v556 = vld [vmem:[#allocation5 + $0xe0] sm:$0xff]
        %v557 = vld [vmem:[#allocation5 + $0xe8] sm:$0xff]
        %v558 = vld [vmem:[#allocation5 + $0xf0] sm:$0xff]
        %v559 = vld [vmem:[#allocation5 + $0xf8] sm:$0xff]
        %v560 = vld [vmem:[#allocation5 + $0x100] sm:$0xff]
        %v561 = vld [vmem:[#allocation5 + $0x108] sm:$0xff]
        %v562 = vld [vmem:[#allocation5 + $0x110] sm:$0xff]
        %v563 = vld [vmem:[#allocation5 + $0x118] sm:$0xff]
        %v564 = vld [vmem:[#allocation5 + $0x120] sm:$0xff]
        %v565 = vld [vmem:[#allocation5 + $0x128] sm:$0xff]
        %v566 = vld [vmem:[#allocation5 + $0x130] sm:$0xff]
        %v567 = vld [vmem:[#allocation5 + $0x138] sm:$0xff]
        %v568 = vld [vmem:[#allocation5 + $0x140] sm:$0xff]
        %v569 = vld [vmem:[#allocation5 + $0x148] sm:$0xff]
        %v570 = vld [vmem:[#allocation5 + $0x150] sm:$0xff]
        %v571 = vld [vmem:[#allocation5 + $0x158] sm:$0xff]
        %v572 = vld [vmem:[#allocation5 + $0x160] sm:$0xff]
        %v573 = vld [vmem:[#allocation5 + $0x168] sm:$0xff]
        %v574 = vld [vmem:[#allocation5 + $0x170] sm:$0xff]
        %v575 = vld [vmem:[#allocation5 + $0x178] sm:$0xff]
        %v576 = vld [vmem:[%s4] sm:$0x1]
        %v578 = vlaneseq
        %v579 = vshrl.u32 %v578, 7
        %v580 = vsub.s32 0, %v579
        %v581 = vrot.slane %v576, %v580
        %583 = vmatprep.subr.mxu0 0.0
        %584 = vmatpush1.msra.mxu0 %v528
        %585 = vmatprep.subr.mxu0 0.0
        %586 = vmatpush1.msra.mxu0 %v529
        %587 = vmatprep.subr.mxu0 0.0
        %588 = vmatpush1.msra.mxu0 %v530
        %589 = vmatprep.subr.mxu0 0.0
        %590 = vmatpush1.msra.mxu0 %v531
        %591 = vmatprep.subr.mxu0 0.0
        %592 = vmatpush1.msra.mxu0 %v532
        %593 = vmatprep.subr.mxu0 0.0
        %594 = vmatpush1.msra.mxu0 %v533
        %595 = vmatprep.subr.mxu0 0.0
        %596 = vmatpush1.msra.mxu0 %v534
        %597 = vmatprep.subr.mxu0 0.0
        %598 = vmatpush1.msra.mxu0 %v535
        %599 = vmatprep.subr.mxu0 0.0
        %600 = vmatpush1.msra.mxu0 %v536
        %601 = vmatprep.subr.mxu0 0.0
        %602 = vmatpush1.msra.mxu0 %v537
        %603 = vmatprep.subr.mxu0 0.0
        %604 = vmatpush1.msra.mxu0 %v538
        %605 = vmatprep.subr.mxu0 0.0
        %606 = vmatpush1.msra.mxu0 %v539
        %607 = vmatprep.subr.mxu0 0.0
        %608 = vmatpush1.msra.mxu0 %v540
        %609 = vmatprep.subr.mxu0 0.0
        %610 = vmatpush1.msra.mxu0 %v541
        %611 = vmatprep.subr.mxu0 0.0
        %612 = vmatpush1.msra.mxu0 %v542
        %613 = vmatprep.subr.mxu0 0.0
        %614 = vmatpush1.msra.mxu0 %v543
        %615 = vmatprep.subr.mxu0 0.0
        %616 = vmatpush1.msra.mxu0 %v544
        %617 = vmatprep.subr.mxu0 0.0
        %618 = vmatpush1.msra.mxu0 %v545
        %619 = vmatprep.subr.mxu0 0.0
        %620 = vmatpush1.msra.mxu0 %v546
        %621 = vmatprep.subr.mxu0 0.0
        %622 = vmatpush1.msra.mxu0 %v547
        %623 = vmatprep.subr.mxu0 0.0
        %624 = vmatpush1.msra.mxu0 %v548
        %625 = vmatprep.subr.mxu0 0.0
        %626 = vmatpush1.msra.mxu0 %v549
        %627 = vmatprep.subr.mxu0 0.0
        %628 = vmatpush1.msra.mxu0 %v550
        %629 = vmatprep.subr.mxu0 0.0
        %630 = vmatpush1.msra.mxu0 %v551
        %631 = vmatprep.subr.mxu0 0.0
        %632 = vmatpush1.msra.mxu0 %v552
        %633 = vmatprep.subr.mxu0 0.0
        %634 = vmatpush1.msra.mxu0 %v553
        %635 = vmatprep.subr.mxu0 0.0
        %636 = vmatpush1.msra.mxu0 %v554
        %637 = vmatprep.subr.mxu0 0.0
        %638 = vmatpush1.msra.mxu0 %v555
        %639 = vmatprep.subr.mxu0 0.0
        %640 = vmatpush1.msra.mxu0 %v556
        %641 = vmatprep.subr.mxu0 0.0
        %642 = vmatpush1.msra.mxu0 %v557
        %643 = vmatprep.subr.mxu0 0.0
        %644 = vmatpush1.msra.mxu0 %v558
        %645 = vmatprep.subr.mxu0 0.0
        %646 = vmatpush1.msra.mxu0 %v559
        %647 = vmatprep.mubr.f32.mxu0 %v516
        %648 = vmatmul.mubr.f32.gmra.mrb[0].mxu0 %v508
        %v649 = vpop.f32.mrb[0].mxu0
        %v650 = vadd.f32 %v581, %v649
        %v651 = vpop.f32.mrb[0].mxu0
        %652 = vmatprep.mubr.f32.mxu0 %v518
        %653 = vmatmul.mubr.f32.gmra.mrb[0].mxu0 %v509
        %v654 = vpop.f32.mrb[0].mxu0
        %v655 = vadd.f32 %v581, %v654
        %v656 = vpop.f32.mrb[0].mxu0
        %657 = vdwg.mxu0
        %658 = vmatprep.subr.mxu0 0.0
        %659 = vmatpush1.msra.mxu0 %v560
        %660 = vmatprep.subr.mxu0 0.0
        %661 = vmatpush1.msra.mxu0 %v561
        %662 = vmatprep.subr.mxu0 0.0
        %663 = vmatpush1.msra.mxu0 %v562
        %664 = vmatprep.subr.mxu0 0.0
        %665 = vmatpush1.msra.mxu0 %v563
        %666 = vmatprep.subr.mxu0 0.0
        %667 = vmatpush1.msra.mxu0 %v564
        %668 = vmatprep.subr.mxu0 0.0
        %669 = vmatpush1.msra.mxu0 %v565
        %670 = vmatprep.subr.mxu0 0.0
        %671 = vmatpush1.msra.mxu0 %v566
        %672 = vmatprep.subr.mxu0 0.0
        %673 = vmatpush1.msra.mxu0 %v567
        %674 = vmatprep.subr.mxu0 0.0
        %675 = vmatpush1.msra.mxu0 %v568
        %676 = vmatprep.subr.mxu0 0.0
        %677 = vmatpush1.msra.mxu0 %v569
        %678 = vmatprep.subr.mxu0 0.0
        %679 = vmatpush1.msra.mxu0 %v570
        %680 = vmatprep.subr.mxu0 0.0
        %681 = vmatpush1.msra.mxu0 %v571
        %682 = vmatprep.subr.mxu0 0.0
        %683 = vmatpush1.msra.mxu0 %v572
        %684 = vmatprep.subr.mxu0 0.0
        %685 = vmatpush1.msra.mxu0 %v573
        %686 = vmatprep.subr.mxu0 0.0
        %687 = vmatpush1.msra.mxu0 %v574
        %688 = vmatprep.subr.mxu0 0.0
        %689 = vmatpush1.msra.mxu0 %v575
        %690 = vmatprep.subr.mxu0 0.0
        %691 = vmatpush1.msra.mxu0 0.0
        %692 = vmatprep.subr.mxu0 0.0
        %693 = vmatpush1.msra.mxu0 0.0
        %694 = vmatprep.subr.mxu0 0.0
        %695 = vmatpush1.msra.mxu0 0.0
        %696 = vmatprep.subr.mxu0 0.0
        %697 = vmatpush1.msra.mxu0 0.0
        %698 = vmatprep.subr.mxu0 0.0
        %699 = vmatpush1.msra.mxu0 0.0
        %700 = vmatprep.subr.mxu0 0.0
        %701 = vmatpush1.msra.mxu0 0.0
        %702 = vmatprep.subr.mxu0 0.0
        %703 = vmatpush1.msra.mxu0 0.0
        %704 = vmatprep.subr.mxu0 0.0
        %705 = vmatpush1.msra.mxu0 0.0
        %706 = vmatprep.subr.mxu0 0.0
        %707 = vmatpush1.msra.mxu0 0.0
        %708 = vmatprep.subr.mxu0 0.0
        %709 = vmatpush1.msra.mxu0 0.0
        %710 = vmatprep.subr.mxu0 0.0
        %711 = vmatpush1.msra.mxu0 0.0
        %712 = vmatprep.subr.mxu0 0.0
        %713 = vmatpush1.msra.mxu0 0.0
        %714 = vmatprep.subr.mxu0 0.0
        %715 = vmatpush1.msra.mxu0 0.0
        %716 = vmatprep.subr.mxu0 0.0
        %717 = vmatpush1.msra.mxu0 0.0
        %718 = vmatprep.subr.mxu0 0.0
        %719 = vmatpush1.msra.mxu0 0.0
        %720 = vmatprep.subr.mxu0 0.0
        %721 = vmatpush1.msra.mxu0 0.0
        %722 = vmatprep.mubr.f32.mxu0 0.0
        %723 = vmatmul.mubr.f32.gmra.mrb[0].mxu0 %v523
        %v724 = vpop.f32.mrb[0].mxu0
        %v725 = vadd.f32 %v650, %v724
        %v726 = vpop.f32.mrb[0].mxu0
        %727 = vmatprep.mubr.f32.mxu0 0.0
        %728 = vmatmul.mubr.f32.gmra.mrb[0].mxu0 %v525
        %v729 = vpop.f32.mrb[0].mxu0
        %v730 = vadd.f32 %v655, %v729
        %v731 = vpop.f32.mrb[0].mxu0
        %732 = vdwg.mxu0
        %v733 = vadd.f32 %v725, %v271
        %v734 = vadd.f32 %v730, %v273
        %v735 = vmax.f32 %v733, 0.0
        %v736 = vmax.f32 %v734, 0.0
        %737 = vst [vmem:[%s247] sm:$0xff] %v735
        %738 = vst [vmem:[%s247 + $0x8] sm:$0xff] %v736
        %s739 = sand.u32 %s139, 1
        %s740 = scalar_lea.sflag [#allocation4], %s739
        %s741 = sand.u32 %s139, 1
        %s742 = smul.addr %s741, 16
        %s743 = scalar_lea.vmem [#allocation7], %s742
        // Predicated region
        $region49: #{tpu_custom_call.1} parent=39 // pred_check
          %p744 = pneg %p149
        $region50: #{tpu_custom_call.1} parent=39 // pred_check_branch
          %746 = sbr.rel (%p744) target = $region52
        $region51: #{tpu_custom_call.1} parent=39 // pred_region
          %s748 = ssub.s32 256, 256
          %749 = vsyncadd %s740, %s748
          %s750 = smul.addr %s21, 2
          %s751 = smul.addr %s750, 128
          %s752 = scalar_lea.hbm %s5, %s751
          %s753 = sshll.u32 %s743, 4
          %s754 = int_to_ptr.vmem [resolvable:$true] %s753
          %759 = dma.vmem_to_hbm [thread:$0]  %s754, 256, %s752, %s740, 128, 128, 8
        $region52: #{tpu_custom_call.1} parent=39 // pred_fallthru
          _
      $region40: #{tpu_custom_call.1} parent=5 // pred_fallthru
        _
      %p760 = scmp.le.s32.totalorder 2, %s16
      // Predicated region
      $region53: #{tpu_custom_call.1} parent=5 // pred_check
        %p761 = pneg %p760
      $region54: #{tpu_custom_call.1} parent=5 // pred_check_branch
        %763 = sbr.rel (%p761) target = $region56
      $region55: #{tpu_custom_call.1} parent=5 // pred_region
        %s764 = ssub.s32 %s16, 2
        // Predicated region
        $region57: #{tpu_custom_call.1} parent=55 // pred_check
          %p765 = pneg %p155
        $region58: #{tpu_custom_call.1} parent=55 // pred_check_branch
          %767 = sbr.rel (%p765) target = $region60
        $region59: #{tpu_custom_call.1} parent=55 // pred_region
          %s768 = sand.u32 %s140, 1
          %s769 = scalar_lea.sflag [#allocation4], %s768
          %s770 = sand.u32 %s140, 1
          %s771 = smul.addr %s770, 16
          %s772 = scalar_lea.vmem [#allocation7], %s771
          %773 = dma.done %s769, 256
        $region60: #{tpu_custom_call.1} parent=55 // pred_fallthru
          _
      $region56: #{tpu_custom_call.1} parent=5 // pred_fallthru
        _
    $region6: #{tpu_custom_call.1} parent=1 // loop_footer
      %s20 = sadd.s32 1, %s16
    $region7: #{tpu_custom_call.1} parent=1 // loop_footer_branch
      %15 = sbr.rel target = $region3
    $region8: #{tpu_custom_call.1} parent=1 // loop_exit
      _
    %774 = vsyncpa [#allocation3], 1
    %s775 = scalar_lea.sflag [#allocation3], 1
    %776 = vsyncpa %s775, 1
    %777 = vsyncpa [#allocation6], 1
    %778 = vsyncpa [#allocation4], 1
    %s779 = scalar_lea.sflag [#allocation4], 1
    %780 = vsyncpa %s779, 1

</llo_original>
